<compile_context>
chip_gen: v7x
topology: tpu7x:2x2x1
jax: 0.10.0
libtpu: 0.0.40
codegen_flags: <defaults>
</compile_context>

<pallas_src>
import functools
from math import sqrt

import jax
import jax.numpy as jnp
from jax import lax
from jax.experimental import pallas as pl
from jax.experimental.pallas import tpu as pltpu


def _codebook_kernel(x_ref, embed_ref, embed_sq_ref, q_ref, ind_ref, *, use_bf16):
    # x_ref:        (tm, D) f32 token tile
    # embed_ref:    (C, D)  f32 full codebook for this head
    # embed_sq_ref: (1, C)  f32 precomputed ||e_c||^2
    # q_ref:        (tm, D) f32 quantized output tile
    # ind_ref:      (1, tm) i32 lane-dense nearest-code indices
    x = x_ref[...]
    e = embed_ref[...]
    e_sq = embed_sq_ref[...]
    tm = x.shape[0]
    C = e.shape[0]

    if use_bf16:
        xm = x.astype(jnp.bfloat16)
        em = e.astype(jnp.bfloat16)
    else:
        xm, em = x, e

    # MXU: token-code inner products, contracting both last dims so the (C, D)
    # codebook layout is consumed directly (no transpose copy in the loop).
    scores = lax.dot_general(
        xm, em, dimension_numbers=(((1,), (1,)), ((), ())),
        preferred_element_type=jnp.float32)                          # (tm, C)

    # Squared euclidean distance up to the per-token constant ||x||^2.
    dist2 = e_sq - 2.0 * scores                                      # (tm, C)

    # argmin along codes with first-index tie-break (== torch.argmax(-cdist)).
    min_d = jnp.min(dist2, axis=-1, keepdims=True)                   # (tm, 1)
    iota = lax.broadcasted_iota(jnp.int32, (tm, C), 1)               # (tm, C)
    cand = jnp.where(dist2 <= min_d, iota, jnp.int32(C))
    ind_col = jnp.min(cand, axis=-1, keepdims=True)                  # (tm, 1)

    # Row-select (gather) via one-hot matmul on the MXU; onehot kept in the
    # codebook dtype (exact for 0/1 values).
    onehot = (iota == ind_col).astype(e.dtype)                       # (tm, C)
    q_ref[...] = jnp.dot(onehot, e,
                         preferred_element_type=jnp.float32).astype(q_ref.dtype)

    # Lane-dense index output: recover indices as code_ids @ onehot^T on the
    # MXU so the result lands directly in (1, tm) lane orientation
    # (exact: exactly one 1.0 per row, code ids < 2^24 representable in f32).
    code_ids = lax.broadcasted_iota(jnp.int32, (1, C), 1).astype(jnp.float32)
    ind_row = lax.dot_general(
        code_ids, onehot, dimension_numbers=(((1,), (1,)), ((), ())),
        preferred_element_type=jnp.float32)                          # (1, tm)
    ind_ref[...] = ind_row.astype(jnp.int32)


def euclidean_codebook_forward(x, embed, *, block_tokens=256, use_bf16_matmul=False):
    """x: (b, n, d) or (h, b, n, d) float; embed: (h, c, d) float.

    Returns (quantize, embed_ind) with the same shapes as the PyTorch module.
    """
    if block_tokens % 128 != 0:
        raise ValueError("block_tokens must be a multiple of 128")

    needs_codebook_dim = x.ndim < 4
    x = x.astype(jnp.float32)
    embed = embed.astype(jnp.float32)
    if needs_codebook_dim:
        x = x[None, ...]                      # rearrange '... -> 1 ...'

    H, D = x.shape[0], x.shape[-1]
    lead_shape = x.shape[1:-1]
    N = 1
    for s in lead_shape:
        N *= int(s)
    flat = x.reshape(H, N, D)                 # rearrange 'h ... d -> h (...) d'

    C = embed.shape[1]
    assert embed.shape == (H, C, D)

    tm = block_tokens
    n_blocks = pl.cdiv(N, tm)
    N_pad = n_blocks * tm
    if N_pad != N:
        flat = jnp.pad(flat, ((0, 0), (0, N_pad - N), (0, 0)))

    # Hoisted out of the kernel: per-code squared norms, shaped (H, 1, C).
    embed_sq = jnp.sum(embed * embed, axis=-1)[:, None, :]

    # VMEM budget: double-buffered tiles + (tm, C) intermediates, with slack.
    b4 = 4
    vmem_est = (2 * tm * D * b4          # x tile
                + 2 * C * D * b4         # codebook
                + 2 * C * b4             # codebook sq norms
                + 2 * tm * D * b4        # quantize tile
                + 2 * tm * b4            # index tile
                + 6 * tm * C * b4)       # dist2 / cand / onehot intermediates
    vmem_limit = int(min(64 * 2**20, max(32 * 2**20, 2 * vmem_est)))

    kernel = functools.partial(_codebook_kernel, use_bf16=use_bf16_matmul)

    grid = (H, n_blocks)
    q, ind = pl.pallas_call(
        kernel,
        out_shape=(
            jax.ShapeDtypeStruct((H, N_pad, D), jnp.float32),
            jax.ShapeDtypeStruct((H, 1, N_pad), jnp.int32),
        ),
        grid_spec=pltpu.PrefetchScalarGridSpec(
            num_scalar_prefetch=0,
            grid=grid,
            in_specs=[
                pl.BlockSpec((None, tm, D), lambda h, i: (h, i, 0)),
                pl.BlockSpec((None, C, D), lambda h, i: (h, 0, 0)),
                pl.BlockSpec((None, 1, C), lambda h, i: (h, 0, 0)),
            ],
            out_specs=[
                pl.BlockSpec((None, tm, D), lambda h, i: (h, i, 0)),
                pl.BlockSpec((None, 1, tm), lambda h, i: (h, 0, i)),
            ],
        ),
        compiler_params=pltpu.CompilerParams(
            dimension_semantics=("parallel", "parallel"),
            vmem_limit_bytes=vmem_limit),
    )(flat, embed, embed_sq)

    # Drop the token padding and restore the module's output shapes.
    q = q[:, :N, :]
    ind = ind[:, 0, :N]
    quantize = q.reshape((H,) + lead_shape + (D,))
    embed_ind = ind.reshape((H,) + lead_shape)
    if needs_codebook_dim:
        quantize = quantize[0]                # rearrange '1 ... -> ...'
        embed_ind = embed_ind[0]
    return quantize, embed_ind


def _reference(flat, embed):
    """Pure-JAX mirror of the PyTorch eval-time forward (per head)."""
    diff = flat[:, :, None, :] - embed[:, None, :, :]
    d = jnp.sqrt(jnp.sum(diff * diff, axis=-1))            # cdist
    ref_ind = jnp.argmax(-d, axis=-1)                       # (H, N)
    ref_q = jnp.take_along_axis(embed, ref_ind[..., None], axis=1)
    return ref_q, ref_ind


if __name__ == "__main__":
    # Module hyperparameters (small, consistent with EuclideanCodebook.__init__)
    codebook_size = 256
    dim = 32
    batch, seq = 2, 8

    key = jax.random.PRNGKey(0)
    k_embed, k_x, k_embed4, k_x4 = jax.random.split(key, 4)

    # ---- Test 1: 3-D input (needs_codebook_dim path), num_codebooks = 1 ----
    fan_in = codebook_size * dim
    bound = sqrt(6.0 / fan_in)                 # kaiming-uniform-like init
    embed = jax.random.uniform(
        k_embed, (1, codebook_size, dim),
        minval=-bound, maxval=bound, dtype=jnp.float32)
    x = jax.random.normal(k_x, (batch, seq, dim), dtype=jnp.float32)

    quantize, embed_ind = euclidean_codebook_forward(x, embed)
    quantize = jax.block_until_ready(quantize)
    embed_ind = jax.block_until_ready(embed_ind)

    ref_q, ref_ind = _reference(x.reshape(1, batch * seq, dim), embed)
    ref_q = ref_q.reshape(batch, seq, dim)
    ref_ind = ref_ind.reshape(batch, seq)

    assert quantize.shape == (batch, seq, dim)
    assert embed_ind.shape == (batch, seq)
    assert jnp.array_equal(embed_ind, ref_ind.astype(embed_ind.dtype))
    assert jnp.allclose(quantize, ref_q, atol=1e-6, rtol=1e-6)

    # ---- Test 2: 4-D input (h, b, n, d), num_codebooks = 2 ----
    num_codebooks = 2
    embed4 = jax.random.uniform(
        k_embed4, (num_codebooks, codebook_size, dim),
        minval=-bound, maxval=bound, dtype=jnp.float32)
    x4 = jax.random.normal(k_x4, (num_codebooks, batch, seq, dim),
                           dtype=jnp.float32)

    quantize4, embed_ind4 = euclidean_codebook_forward(x4, embed4)
    quantize4 = jax.block_until_ready(quantize4)
    embed_ind4 = jax.block_until_ready(embed_ind4)

    ref_q4, ref_ind4 = _reference(x4.reshape(num_codebooks, batch * seq, dim),
                                  embed4)
    ref_q4 = ref_q4.reshape(num_codebooks, batch, seq, dim)
    ref_ind4 = ref_ind4.reshape(num_codebooks, batch, seq)

    assert quantize4.shape == (num_codebooks, batch, seq, dim)
    assert embed_ind4.shape == (num_codebooks, batch, seq)
    assert jnp.array_equal(embed_ind4, ref_ind4.astype(embed_ind4.dtype))
    assert jnp.allclose(quantize4, ref_q4, atol=1e-6, rtol=1e-6)

    print("KERNEL_OK")
</pallas_src>

<mosaic_0001>
module attributes {stable_mosaic.version = 11 : i64} {
  func.func @_codebook_kernel(%arg0: i32, %arg1: i32, %arg2: memref<1x256x32xf32, #tpu.memory_space<vmem>>, %arg3: memref<1x256x32xf32, #tpu.memory_space<vmem>>, %arg4: memref<1x1x256xf32, #tpu.memory_space<vmem>>, %arg5: memref<1x256x32xf32, #tpu.memory_space<vmem>>, %arg6: memref<1x1x256xi32, #tpu.memory_space<vmem>>) attributes {dimension_semantics = [#tpu.dimension_semantics<parallel>, #tpu.dimension_semantics<parallel>], iteration_bounds = array<i64: 1, 1>, scalar_prefetch = 0 : i64, scratch_operands = 0 : i64, tpu.core_type = #tpu.core_type<tc>, window_params = [{transform_indices = @transform_0, window_bounds = array<i64: 1, 256, 32>}, {transform_indices = @transform_1, window_bounds = array<i64: 1, 256, 32>}, {transform_indices = @transform_2, window_bounds = array<i64: 1, 1, 256>}, {transform_indices = @transform_3, window_bounds = array<i64: 1, 256, 32>}, {transform_indices = @transform_4, window_bounds = array<i64: 1, 1, 256>}]} {
    %c0 = arith.constant 0 : index
    %c0_0 = arith.constant 0 : index
    %c0_1 = arith.constant 0 : index
    %0 = vector.load %arg2[%c0, %c0_0, %c0_1] : memref<1x256x32xf32, #tpu.memory_space<vmem>>, vector<1x256x32xf32>
    %1 = vector.shape_cast %0 : vector<1x256x32xf32> to vector<256x32xf32>
    %c0_2 = arith.constant 0 : index
    %c0_3 = arith.constant 0 : index
    %c0_4 = arith.constant 0 : index
    %2 = vector.load %arg3[%c0_2, %c0_3, %c0_4] : memref<1x256x32xf32, #tpu.memory_space<vmem>>, vector<1x256x32xf32>
    %3 = vector.shape_cast %2 : vector<1x256x32xf32> to vector<256x32xf32>
    %c0_5 = arith.constant 0 : index
    %c0_6 = arith.constant 0 : index
    %c0_7 = arith.constant 0 : index
    %4 = vector.load %arg4[%c0_5, %c0_6, %c0_7] : memref<1x1x256xf32, #tpu.memory_space<vmem>>, vector<1x1x256xf32>
    %5 = vector.shape_cast %4 : vector<1x1x256xf32> to vector<1x256xf32>
    %cst = arith.constant dense<0.000000e+00> : vector<256x256xf32>
    %6 = tpu.matmul %1, %3, %cst {dimension_numbers = #tpu.dot_dimension_numbers<[1], [1], [0], [0], [0, 0, 1, 0], [], []>} : vector<256x32xf32>, vector<256x32xf32>, vector<256x256xf32> -> vector<256x256xf32>
    %cst_8 = arith.constant 2.000000e+00 : f32
    %7 = vector.broadcast %cst_8 : f32 to vector<256x256xf32>
    %8 = arith.mulf %7, %6 : vector<256x256xf32>
    %9 = vector.broadcast %5 : vector<1x256xf32> to vector<256x256xf32>
    %10 = arith.subf %9, %8 : vector<256x256xf32>
    %cst_9 = arith.constant dense<0x7F800000> : vector<256xf32>
    %11 = vector.multi_reduction <minimumf>, %10, %cst_9 [1] : vector<256x256xf32> to vector<256xf32>
    %12 = vector.shape_cast %11 : vector<256xf32> to vector<256x1xf32>
    %13 = tpu.iota {dimensions = array<i32: 1>} : vector<256x256xi32>
    %14 = vector.broadcast %12 : vector<256x1xf32> to vector<256x256xf32>
    %15 = arith.cmpf ole, %10, %14 : vector<256x256xf32>
    %c256_i32 = arith.constant 256 : i32
    %16 = vector.broadcast %c256_i32 : i32 to vector<256x256xi32>
    %17 = arith.select %15, %13, %16 : vector<256x256xi1>, vector<256x256xi32>
    %cst_10 = arith.constant dense<2147483647> : vector<256xi32>
    %18 = vector.multi_reduction <minsi>, %17, %cst_10 [1] : vector<256x256xi32> to vector<256xi32>
    %19 = vector.shape_cast %18 : vector<256xi32> to vector<256x1xi32>
    %20 = vector.broadcast %19 : vector<256x1xi32> to vector<256x256xi32>
    %21 = arith.cmpi eq, %13, %20 : vector<256x256xi32>
    %22 = arith.extui %21 : vector<256x256xi1> to vector<256x256xi32>
    %23 = arith.sitofp %22 : vector<256x256xi32> to vector<256x256xf32>
    %cst_11 = arith.constant dense<0.000000e+00> : vector<256x32xf32>
    %24 = tpu.matmul %23, %3, %cst_11 {dimension_numbers = #tpu.dot_dimension_numbers<[1], [0], [0], [1], [0, 0, 1, 1], [], []>} : vector<256x256xf32>, vector<256x32xf32>, vector<256x32xf32> -> vector<256x32xf32>
    %c0_12 = arith.constant 0 : index
    %c0_13 = arith.constant 0 : index
    %c0_14 = arith.constant 0 : index
    %25 = vector.load %arg5[%c0_12, %c0_13, %c0_14] : memref<1x256x32xf32, #tpu.memory_space<vmem>>, vector<1x256x32xf32>
    %26 = vector.shape_cast %25 : vector<1x256x32xf32> to vector<256x32xf32>
    %27 = vector.shape_cast %24 : vector<256x32xf32> to vector<1x256x32xf32>
    tpu.vector_store %arg5[%c0_12, %c0_13, %c0_14], %27 {strides = array<i32>} : memref<1x256x32xf32, #tpu.memory_space<vmem>>, vector<1x256x32xf32>,
    %28 = tpu.iota {dimensions = array<i32: 1>} : vector<1x256xi32>
    %29 = arith.sitofp %28 : vector<1x256xi32> to vector<1x256xf32>
    %cst_15 = arith.constant dense<0.000000e+00> : vector<1x256xf32>
    %30 = tpu.matmul %29, %23, %cst_15 {dimension_numbers = #tpu.dot_dimension_numbers<[1], [1], [0], [0], [0, 0, 1, 0], [], []>} : vector<1x256xf32>, vector<256x256xf32>, vector<1x256xf32> -> vector<1x256xf32>
    %31 = arith.fptosi %30 : vector<1x256xf32> to vector<1x256xi32>
    %c0_16 = arith.constant 0 : index
    %c0_17 = arith.constant 0 : index
    %c0_18 = arith.constant 0 : index
    %32 = vector.load %arg6[%c0_16, %c0_17, %c0_18] : memref<1x1x256xi32, #tpu.memory_space<vmem>>, vector<1x1x256xi32>
    %33 = vector.shape_cast %32 : vector<1x1x256xi32> to vector<1x256xi32>
    %34 = vector.shape_cast %31 : vector<1x256xi32> to vector<1x1x256xi32>
    tpu.vector_store %arg6[%c0_16, %c0_17, %c0_18], %34 {strides = array<i32>} : memref<1x1x256xi32, #tpu.memory_space<vmem>>, vector<1x1x256xi32>,
    return
  }
  func.func @transform_0(%arg0: i32, %arg1: i32) -> (i32, i32, i32) {
    %c0_i32 = arith.constant 0 : i32
    %c0_i32_0 = arith.constant 0 : i32
    return %arg0, %arg1, %c0_i32 : i32, i32, i32
  }
  func.func @transform_1(%arg0: i32, %arg1: i32) -> (i32, i32, i32) {
    %c0_i32 = arith.constant 0 : i32
    %c0_i32_0 = arith.constant 0 : i32
    %c0_i32_1 = arith.constant 0 : i32
    return %arg0, %c0_i32, %c0_i32_0 : i32, i32, i32
  }
  func.func @transform_2(%arg0: i32, %arg1: i32) -> (i32, i32, i32) {
    %c0_i32 = arith.constant 0 : i32
    %c0_i32_0 = arith.constant 0 : i32
    %c0_i32_1 = arith.constant 0 : i32
    return %arg0, %c0_i32, %c0_i32_0 : i32, i32, i32
  }
  func.func @transform_3(%arg0: i32, %arg1: i32) -> (i32, i32, i32) {
    %c0_i32 = arith.constant 0 : i32
    %c0_i32_0 = arith.constant 0 : i32
    return %arg0, %arg1, %c0_i32 : i32, i32, i32
  }
  func.func @transform_4(%arg0: i32, %arg1: i32) -> (i32, i32, i32) {
    %c0_i32 = arith.constant 0 : i32
    %c0_i32_0 = arith.constant 0 : i32
    return %arg0, %c0_i32, %arg1 : i32, i32, i32
  }
}

</mosaic_0001>

<llo_original>
// kernel: tpu_custom_call.1
$region0: #{tpu_custom_call.1}
  #allocation0 [shape = 'u32[]', space=smem, size = 0x4, offset = 0x4, fixed_abs, tag = 'smem constant byte address 0x4 - core index']
  #allocation1 [shape = 'u32[144,128]{1,0:T(1,128)}', space=vmem, size = 0x12000, scoped, tag = 'internal scratch']
  %s0 = inlined_call_operand.vmem [shape: f32[1,256,32], index: 0, kind: input, shape index: {}]
  %s1 = inlined_call_operand.vmem [shape: f32[1,256,32], index: 1, kind: input, shape index: {}]
  %s2 = inlined_call_operand.vmem [shape: f32[1,1,256], index: 2, kind: input, shape index: {}]
  %s3 = inlined_call_operand.vmem [shape: f32[1,256,32], index: 3, kind: output, shape index: {0}]
  %s4 = inlined_call_operand.hbm [shape: s32[1,1,256], index: 4, kind: output, shape index: {1}]
  %5 = xla_tuple %s3, %s4
  %s6 = sld [smem:[#allocation0]]
  $region30: #{tpu_custom_call.1} parent=0
    _
  %s8 = ssub.s32 1, %s6
  %s9 = scalar_select 0, %s8, %s6
  $region1: #{tpu_custom_call.1} parent=0
    #allocation2 [shape = 'u8[1024]{0}', space=vmem, size = 0x400, scoped, tag = 'output window, operand 1, single buffered']
    #allocation3 [shape = 's32[1]{0}', space=sflag, size = 0x4, scoped, tag = 'scoped memory for tpu_custom_call.1']
    %10 = vsyncpa [#allocation3], 0
    // Predicated region
    $region2: #{tpu_custom_call.1} parent=1 // pred_check
      _
    $region3: #{tpu_custom_call.1} parent=1 // pred_check_branch
      %12 = sbr.rel (0) target = $region5
    $region4: #{tpu_custom_call.1} parent=1 // pred_region
      _
    $region5: #{tpu_custom_call.1} parent=1 // pred_fallthru
      _
    // Predicated region
    $region6: #{tpu_custom_call.1} parent=1 // pred_check
      _
    $region7: #{tpu_custom_call.1} parent=1 // pred_check_branch
      %14 = sbr.rel (0) target = $region9
    $region8: #{tpu_custom_call.1} parent=1 // pred_region
      _
    $region9: #{tpu_custom_call.1} parent=1 // pred_fallthru
      _
    // Predicated region
    $region10: #{tpu_custom_call.1} parent=1 // pred_check
      _
    $region11: #{tpu_custom_call.1} parent=1 // pred_check_branch
      %16 = sbr.rel (0) target = $region13
    $region12: #{tpu_custom_call.1} parent=1 // pred_region
      _
    $region13: #{tpu_custom_call.1} parent=1 // pred_fallthru
      _
    %v17 = vld [vmem:[%s0] sm:$0xff]
    %v18 = vld [vmem:[%s0 + $0x8] sm:$0xff]
    %v19 = vld [vmem:[%s0 + $0x10] sm:$0xff]
    %v20 = vld [vmem:[%s0 + $0x18] sm:$0xff]
    %v21 = vld [vmem:[%s0 + $0x20] sm:$0xff]
    %v22 = vld [vmem:[%s0 + $0x28] sm:$0xff]
    %v23 = vld [vmem:[%s0 + $0x30] sm:$0xff]
    %v24 = vld [vmem:[%s0 + $0x38] sm:$0xff]
    %v25 = vld [vmem:[%s0 + $0x40] sm:$0xff]
    %v26 = vld [vmem:[%s0 + $0x48] sm:$0xff]
    %v27 = vld [vmem:[%s0 + $0x50] sm:$0xff]
    %v28 = vld [vmem:[%s0 + $0x58] sm:$0xff]
    %v29 = vld [vmem:[%s0 + $0x60] sm:$0xff]
    %v30 = vld [vmem:[%s0 + $0x68] sm:$0xff]
    %v31 = vld [vmem:[%s0 + $0x70] sm:$0xff]
    %v32 = vld [vmem:[%s0 + $0x78] sm:$0xff]
    %v33 = vld [vmem:[%s0 + $0x80] sm:$0xff]
    %v34 = vld [vmem:[%s0 + $0x88] sm:$0xff]
    %v35 = vld [vmem:[%s0 + $0x90] sm:$0xff]
    %v36 = vld [vmem:[%s0 + $0x98] sm:$0xff]
    %v37 = vld [vmem:[%s0 + $0xa0] sm:$0xff]
    %v38 = vld [vmem:[%s0 + $0xa8] sm:$0xff]
    %v39 = vld [vmem:[%s0 + $0xb0] sm:$0xff]
    %v40 = vld [vmem:[%s0 + $0xb8] sm:$0xff]
    %v41 = vld [vmem:[%s0 + $0xc0] sm:$0xff]
    %v42 = vld [vmem:[%s0 + $0xc8] sm:$0xff]
    %v43 = vld [vmem:[%s0 + $0xd0] sm:$0xff]
    %v44 = vld [vmem:[%s0 + $0xd8] sm:$0xff]
    %v45 = vld [vmem:[%s0 + $0xe0] sm:$0xff]
    %v46 = vld [vmem:[%s0 + $0xe8] sm:$0xff]
    %v47 = vld [vmem:[%s0 + $0xf0] sm:$0xff]
    %v48 = vld [vmem:[%s0 + $0xf8] sm:$0xff]
    %v49 = vld [vmem:[%s1] sm:$0xff]
    %v50 = vld [vmem:[%s1 + $0x8] sm:$0xff]
    %v51 = vld [vmem:[%s1 + $0x10] sm:$0xff]
    %v52 = vld [vmem:[%s1 + $0x18] sm:$0xff]
    %v53 = vld [vmem:[%s1 + $0x20] sm:$0xff]
    %v54 = vld [vmem:[%s1 + $0x28] sm:$0xff]
    %v55 = vld [vmem:[%s1 + $0x30] sm:$0xff]
    %v56 = vld [vmem:[%s1 + $0x38] sm:$0xff]
    %v57 = vld [vmem:[%s1 + $0x40] sm:$0xff]
    %v58 = vld [vmem:[%s1 + $0x48] sm:$0xff]
    %v59 = vld [vmem:[%s1 + $0x50] sm:$0xff]
    %v60 = vld [vmem:[%s1 + $0x58] sm:$0xff]
    %v61 = vld [vmem:[%s1 + $0x60] sm:$0xff]
    %v62 = vld [vmem:[%s1 + $0x68] sm:$0xff]
    %v63 = vld [vmem:[%s1 + $0x70] sm:$0xff]
    %v64 = vld [vmem:[%s1 + $0x78] sm:$0xff]
    %v65 = vld [vmem:[%s1 + $0x80] sm:$0xff]
    %v66 = vld [vmem:[%s1 + $0x88] sm:$0xff]
    %v67 = vld [vmem:[%s1 + $0x90] sm:$0xff]
    %v68 = vld [vmem:[%s1 + $0x98] sm:$0xff]
    %v69 = vld [vmem:[%s1 + $0xa0] sm:$0xff]
    %v70 = vld [vmem:[%s1 + $0xa8] sm:$0xff]
    %v71 = vld [vmem:[%s1 + $0xb0] sm:$0xff]
    %v72 = vld [vmem:[%s1 + $0xb8] sm:$0xff]
    %v73 = vld [vmem:[%s1 + $0xc0] sm:$0xff]
    %v74 = vld [vmem:[%s1 + $0xc8] sm:$0xff]
    %v75 = vld [vmem:[%s1 + $0xd0] sm:$0xff]
    %v76 = vld [vmem:[%s1 + $0xd8] sm:$0xff]
    %v77 = vld [vmem:[%s1 + $0xe0] sm:$0xff]
    %v78 = vld [vmem:[%s1 + $0xe8] sm:$0xff]
    %v79 = vld [vmem:[%s1 + $0xf0] sm:$0xff]
    %v80 = vld [vmem:[%s1 + $0xf8] sm:$0xff]
    %v81 = vld [vmem:[%s2] sm:$0x3]
    %vm82 = vcmask 261120
    %v84 = vsel %vm82, %v17, 0
    %v87 = vsel %vm82, %v18, 0
    %v90 = vsel %vm82, %v19, 0
    %v93 = vsel %vm82, %v20, 0
    %v96 = vsel %vm82, %v21, 0
    %v99 = vsel %vm82, %v22, 0
    %v102 = vsel %vm82, %v23, 0
    %v105 = vsel %vm82, %v24, 0
    %v108 = vsel %vm82, %v25, 0
    %v111 = vsel %vm82, %v26, 0
    %v114 = vsel %vm82, %v27, 0
    %v117 = vsel %vm82, %v28, 0
    %v120 = vsel %vm82, %v29, 0
    %v123 = vsel %vm82, %v30, 0
    %v126 = vsel %vm82, %v31, 0
    %v129 = vsel %vm82, %v32, 0
    %v132 = vsel %vm82, %v33, 0
    %v135 = vsel %vm82, %v34, 0
    %v138 = vsel %vm82, %v35, 0
    %v141 = vsel %vm82, %v36, 0
    %v144 = vsel %vm82, %v37, 0
    %v147 = vsel %vm82, %v38, 0
    %v150 = vsel %vm82, %v39, 0
    %v153 = vsel %vm82, %v40, 0
    %v156 = vsel %vm82, %v41, 0
    %v159 = vsel %vm82, %v42, 0
    %v162 = vsel %vm82, %v43, 0
    %v165 = vsel %vm82, %v44, 0
    %v168 = vsel %vm82, %v45, 0
    %v171 = vsel %vm82, %v46, 0
    %v174 = vsel %vm82, %v47, 0
    %v177 = vsel %vm82, %v48, 0
    %v180 = vsel %vm82, %v49, 0
    %v183 = vsel %vm82, %v50, 0
    %v186 = vsel %vm82, %v51, 0
    %v189 = vsel %vm82, %v52, 0
    %v192 = vsel %vm82, %v53, 0
    %v195 = vsel %vm82, %v54, 0
    %v198 = vsel %vm82, %v55, 0
    %v201 = vsel %vm82, %v56, 0
    %v204 = vsel %vm82, %v57, 0
    %v207 = vsel %vm82, %v58, 0
    %v210 = vsel %vm82, %v59, 0
    %v213 = vsel %vm82, %v60, 0
    %v216 = vsel %vm82, %v61, 0
    %v219 = vsel %vm82, %v62, 0
    %v222 = vsel %vm82, %v63, 0
    %v225 = vsel %vm82, %v64, 0
    %v228 = vsel %vm82, %v65, 0
    %v231 = vsel %vm82, %v66, 0
    %v234 = vsel %vm82, %v67, 0
    %v237 = vsel %vm82, %v68, 0
    %v240 = vsel %vm82, %v69, 0
    %v243 = vsel %vm82, %v70, 0
    %v246 = vsel %vm82, %v71, 0
    %v249 = vsel %vm82, %v72, 0
    %v252 = vsel %vm82, %v73, 0
    %v255 = vsel %vm82, %v74, 0
    %v258 = vsel %vm82, %v75, 0
    %v261 = vsel %vm82, %v76, 0
    %v264 = vsel %vm82, %v77, 0
    %v267 = vsel %vm82, %v78, 0
    %v270 = vsel %vm82, %v79, 0
    %v273 = vsel %vm82, %v80, 0
    %275 = vmatprep.subr.mxu0 0.0
    %276 = vmatpush1.xpose.msra.mxu0 %v180
    %277 = vmatprep.subr.mxu0 0.0
    %278 = vmatpush1.xpose.msra.mxu0 %v183
    %279 = vmatprep.subr.mxu0 0.0
    %280 = vmatpush1.xpose.msra.mxu0 %v186
    %281 = vmatprep.subr.mxu0 0.0
    %282 = vmatpush1.xpose.msra.mxu0 %v189
    %283 = vmatprep.subr.mxu0 0.0
    %284 = vmatpush1.xpose.msra.mxu0 %v192
    %285 = vmatprep.subr.mxu0 0.0
    %286 = vmatpush1.xpose.msra.mxu0 %v195
    %287 = vmatprep.subr.mxu0 0.0
    %288 = vmatpush1.xpose.msra.mxu0 %v198
    %289 = vmatprep.subr.mxu0 0.0
    %290 = vmatpush1.xpose.msra.mxu0 %v201
    %291 = vmatprep.subr.mxu0 0.0
    %292 = vmatpush1.xpose.msra.mxu0 %v204
    %293 = vmatprep.subr.mxu0 0.0
    %294 = vmatpush1.xpose.msra.mxu0 %v207
    %295 = vmatprep.subr.mxu0 0.0
    %296 = vmatpush1.xpose.msra.mxu0 %v210
    %297 = vmatprep.subr.mxu0 0.0
    %298 = vmatpush1.xpose.msra.mxu0 %v213
    %299 = vmatprep.subr.mxu0 0.0
    %300 = vmatpush1.xpose.msra.mxu0 %v216
    %301 = vmatprep.subr.mxu0 0.0
    %302 = vmatpush1.xpose.msra.mxu0 %v219
    %303 = vmatprep.subr.mxu0 0.0
    %304 = vmatpush1.xpose.msra.mxu0 %v222
    %305 = vmatprep.subr.mxu0 0.0
    %306 = vmatpush1.xpose.msra.mxu0 %v225
    %307 = vmatprep.subr.mxu0 0.0
    %308 = vmatpush1.xpose.msra.mxu0 %v228
    %309 = vmatprep.subr.mxu0 0.0
    %310 = vmatpush1.xpose.msra.mxu0 %v231
    %311 = vmatprep.subr.mxu0 0.0
    %312 = vmatpush1.xpose.msra.mxu0 %v234
    %313 = vmatprep.subr.mxu0 0.0
    %314 = vmatpush1.xpose.msra.mxu0 %v237
    %315 = vmatprep.subr.mxu0 0.0
    %316 = vmatpush1.xpose.msra.mxu0 %v240
    %317 = vmatprep.subr.mxu0 0.0
    %318 = vmatpush1.xpose.msra.mxu0 %v243
    %319 = vmatprep.subr.mxu0 0.0
    %320 = vmatpush1.xpose.msra.mxu0 %v246
    %321 = vmatprep.subr.mxu0 0.0
    %322 = vmatpush1.xpose.msra.mxu0 %v249
    %323 = vmatprep.subr.mxu0 0.0
    %324 = vmatpush1.xpose.msra.mxu0 %v252
    %325 = vmatprep.subr.mxu0 0.0
    %326 = vmatpush1.xpose.msra.mxu0 %v255
    %327 = vmatprep.subr.mxu0 0.0
    %328 = vmatpush1.xpose.msra.mxu0 %v258
    %329 = vmatprep.subr.mxu0 0.0
    %330 = vmatpush1.xpose.msra.mxu0 %v261
    %331 = vmatprep.subr.mxu0 0.0
    %332 = vmatpush1.xpose.msra.mxu0 %v264
    %333 = vmatprep.subr.mxu0 0.0
    %334 = vmatpush1.xpose.msra.mxu0 %v267
    %335 = vmatprep.subr.mxu0 0.0
    %336 = vmatpush1.xpose.msra.mxu0 %v270
    %337 = vmatprep.subr.mxu0 0.0
    %338 = vmatpush1.xpose.msra.mxu0 %v273
    %339 = vmatprep.mubr.f32.mxu0 0.0
    %340 = vmatmul.mubr.f32.gmra.mrb[0].mxu0 %v84
    %v341 = vpop.f32.mrb[0].mxu0
    %v342 = vadd.f32 0.0, %v341
    %v343 = vpop.f32.mrb[0].mxu0
    %v344 = vadd.f32 0.0, %v343
    %345 = vmatprep.mubr.f32.mxu0 0.0
    %346 = vmatmul.mubr.f32.gmra.mrb[0].mxu0 %v87
    %v347 = vpop.f32.mrb[0].mxu0
    %v348 = vadd.f32 0.0, %v347
    %v349 = vpop.f32.mrb[0].mxu0
    %v350 = vadd.f32 0.0, %v349
    %351 = vmatprep.mubr.f32.mxu0 0.0
    %352 = vmatmul.mubr.f32.gmra.mrb[0].mxu0 %v90
    %v353 = vpop.f32.mrb[0].mxu0
    %v354 = vadd.f32 0.0, %v353
    %v355 = vpop.f32.mrb[0].mxu0
    %v356 = vadd.f32 0.0, %v355
    %357 = vmatprep.mubr.f32.mxu0 0.0
    %358 = vmatmul.mubr.f32.gmra.mrb[0].mxu0 %v93
    %v359 = vpop.f32.mrb[0].mxu0
    %v360 = vadd.f32 0.0, %v359
    %v361 = vpop.f32.mrb[0].mxu0
    %v362 = vadd.f32 0.0, %v361
    %363 = vmatprep.mubr.f32.mxu0 0.0
    %364 = vmatmul.mubr.f32.gmra.mrb[0].mxu0 %v96
    %v365 = vpop.f32.mrb[0].mxu0
    %v366 = vadd.f32 0.0, %v365
    %v367 = vpop.f32.mrb[0].mxu0
    %v368 = vadd.f32 0.0, %v367
    %369 = vmatprep.mubr.f32.mxu0 0.0
    %370 = vmatmul.mubr.f32.gmra.mrb[0].mxu0 %v99
    %v371 = vpop.f32.mrb[0].mxu0
    %v372 = vadd.f32 0.0, %v371
    %v373 = vpop.f32.mrb[0].mxu0
    %v374 = vadd.f32 0.0, %v373
    %375 = vmatprep.mubr.f32.mxu0 0.0
    %376 = vmatmul.mubr.f32.gmra.mrb[0].mxu0 %v102
    %v377 = vpop.f32.mrb[0].mxu0
    %v378 = vadd.f32 0.0, %v377
    %v379 = vpop.f32.mrb[0].mxu0
    %v380 = vadd.f32 0.0, %v379
    %381 = vmatprep.mubr.f32.mxu0 0.0
    %382 = vmatmul.mubr.f32.gmra.mrb[0].mxu0 %v105
    %v383 = vpop.f32.mrb[0].mxu0
    %v384 = vadd.f32 0.0, %v383
    %v385 = vpop.f32.mrb[0].mxu0
    %v386 = vadd.f32 0.0, %v385
    %387 = vmatprep.mubr.f32.mxu0 0.0
    %388 = vmatmul.mubr.f32.gmra.mrb[0].mxu0 %v108
    %v389 = vpop.f32.mrb[0].mxu0
    %v390 = vadd.f32 0.0, %v389
    %v391 = vpop.f32.mrb[0].mxu0
    %v392 = vadd.f32 0.0, %v391
    %393 = vmatprep.mubr.f32.mxu0 0.0
    %394 = vmatmul.mubr.f32.gmra.mrb[0].mxu0 %v111
    %v395 = vpop.f32.mrb[0].mxu0
    %v396 = vadd.f32 0.0, %v395
    %v397 = vpop.f32.mrb[0].mxu0
    %v398 = vadd.f32 0.0, %v397
    %399 = vmatprep.mubr.f32.mxu0 0.0
    %400 = vmatmul.mubr.f32.gmra.mrb[0].mxu0 %v114
    %v401 = vpop.f32.mrb[0].mxu0
    %v402 = vadd.f32 0.0, %v401
    %v403 = vpop.f32.mrb[0].mxu0
    %v404 = vadd.f32 0.0, %v403
    %405 = vmatprep.mubr.f32.mxu0 0.0
    %406 = vmatmul.mubr.f32.gmra.mrb[0].mxu0 %v117
    %v407 = vpop.f32.mrb[0].mxu0
    %v408 = vadd.f32 0.0, %v407
    %v409 = vpop.f32.mrb[0].mxu0
    %v410 = vadd.f32 0.0, %v409
    %411 = vmatprep.mubr.f32.mxu0 0.0
    %412 = vmatmul.mubr.f32.gmra.mrb[0].mxu0 %v120
    %v413 = vpop.f32.mrb[0].mxu0
    %v414 = vadd.f32 0.0, %v413
    %v415 = vpop.f32.mrb[0].mxu0
    %v416 = vadd.f32 0.0, %v415
    %417 = vmatprep.mubr.f32.mxu0 0.0
    %418 = vmatmul.mubr.f32.gmra.mrb[0].mxu0 %v123
    %v419 = vpop.f32.mrb[0].mxu0
    %v420 = vadd.f32 0.0, %v419
    %v421 = vpop.f32.mrb[0].mxu0
    %v422 = vadd.f32 0.0, %v421
    %423 = vmatprep.mubr.f32.mxu0 0.0
    %424 = vmatmul.mubr.f32.gmra.mrb[0].mxu0 %v126
    %v425 = vpop.f32.mrb[0].mxu0
    %v426 = vadd.f32 0.0, %v425
    %v427 = vpop.f32.mrb[0].mxu0
    %v428 = vadd.f32 0.0, %v427
    %429 = vmatprep.mubr.f32.mxu0 0.0
    %430 = vmatmul.mubr.f32.gmra.mrb[0].mxu0 %v129
    %v431 = vpop.f32.mrb[0].mxu0
    %v432 = vadd.f32 0.0, %v431
    %v433 = vpop.f32.mrb[0].mxu0
    %v434 = vadd.f32 0.0, %v433
    %435 = vmatprep.mubr.f32.mxu0 0.0
    %436 = vmatmul.mubr.f32.gmra.mrb[0].mxu0 %v132
    %v437 = vpop.f32.mrb[0].mxu0
    %v438 = vadd.f32 0.0, %v437
    %v439 = vpop.f32.mrb[0].mxu0
    %v440 = vadd.f32 0.0, %v439
    %441 = vmatprep.mubr.f32.mxu0 0.0
    %442 = vmatmul.mubr.f32.gmra.mrb[0].mxu0 %v135
    %v443 = vpop.f32.mrb[0].mxu0
    %v444 = vadd.f32 0.0, %v443
    %v445 = vpop.f32.mrb[0].mxu0
    %v446 = vadd.f32 0.0, %v445
    %447 = vmatprep.mubr.f32.mxu0 0.0
    %448 = vmatmul.mubr.f32.gmra.mrb[0].mxu0 %v138
    %v449 = vpop.f32.mrb[0].mxu0
    %v450 = vadd.f32 0.0, %v449
    %v451 = vpop.f32.mrb[0].mxu0
    %v452 = vadd.f32 0.0, %v451
    %453 = vmatprep.mubr.f32.mxu0 0.0
    %454 = vmatmul.mubr.f32.gmra.mrb[0].mxu0 %v141
    %v455 = vpop.f32.mrb[0].mxu0
    %v456 = vadd.f32 0.0, %v455
    %v457 = vpop.f32.mrb[0].mxu0
    %v458 = vadd.f32 0.0, %v457
    %459 = vmatprep.mubr.f32.mxu0 0.0
    %460 = vmatmul.mubr.f32.gmra.mrb[0].mxu0 %v144
    %v461 = vpop.f32.mrb[0].mxu0
    %v462 = vadd.f32 0.0, %v461
    %v463 = vpop.f32.mrb[0].mxu0
    %v464 = vadd.f32 0.0, %v463
    %465 = vmatprep.mubr.f32.mxu0 0.0
    %466 = vmatmul.mubr.f32.gmra.mrb[0].mxu0 %v147
    %v467 = vpop.f32.mrb[0].mxu0
    %v468 = vadd.f32 0.0, %v467
    %v469 = vpop.f32.mrb[0].mxu0
    %v470 = vadd.f32 0.0, %v469
    %471 = vmatprep.mubr.f32.mxu0 0.0
    %472 = vmatmul.mubr.f32.gmra.mrb[0].mxu0 %v150
    %v473 = vpop.f32.mrb[0].mxu0
    %v474 = vadd.f32 0.0, %v473
    %v475 = vpop.f32.mrb[0].mxu0
    %v476 = vadd.f32 0.0, %v475
    %477 = vmatprep.mubr.f32.mxu0 0.0
    %478 = vmatmul.mubr.f32.gmra.mrb[0].mxu0 %v153
    %v479 = vpop.f32.mrb[0].mxu0
    %v480 = vadd.f32 0.0, %v479
    %v481 = vpop.f32.mrb[0].mxu0
    %v482 = vadd.f32 0.0, %v481
    %483 = vmatprep.mubr.f32.mxu0 0.0
    %484 = vmatmul.mubr.f32.gmra.mrb[0].mxu0 %v156
    %v485 = vpop.f32.mrb[0].mxu0
    %v486 = vadd.f32 0.0, %v485
    %v487 = vpop.f32.mrb[0].mxu0
    %v488 = vadd.f32 0.0, %v487
    %489 = vmatprep.mubr.f32.mxu0 0.0
    %490 = vmatmul.mubr.f32.gmra.mrb[0].mxu0 %v159
    %v491 = vpop.f32.mrb[0].mxu0
    %v492 = vadd.f32 0.0, %v491
    %v493 = vpop.f32.mrb[0].mxu0
    %v494 = vadd.f32 0.0, %v493
    %495 = vmatprep.mubr.f32.mxu0 0.0
    %496 = vmatmul.mubr.f32.gmra.mrb[0].mxu0 %v162
    %v497 = vpop.f32.mrb[0].mxu0
    %v498 = vadd.f32 0.0, %v497
    %v499 = vpop.f32.mrb[0].mxu0
    %v500 = vadd.f32 0.0, %v499
    %501 = vmatprep.mubr.f32.mxu0 0.0
    %502 = vmatmul.mubr.f32.gmra.mrb[0].mxu0 %v165
    %v503 = vpop.f32.mrb[0].mxu0
    %v504 = vadd.f32 0.0, %v503
    %v505 = vpop.f32.mrb[0].mxu0
    %v506 = vadd.f32 0.0, %v505
    %507 = vmatprep.mubr.f32.mxu0 0.0
    %508 = vmatmul.mubr.f32.gmra.mrb[0].mxu0 %v168
    %v509 = vpop.f32.mrb[0].mxu0
    %v510 = vadd.f32 0.0, %v509
    %v511 = vpop.f32.mrb[0].mxu0
    %v512 = vadd.f32 0.0, %v511
    %513 = vmatprep.mubr.f32.mxu0 0.0
    %514 = vmatmul.mubr.f32.gmra.mrb[0].mxu0 %v171
    %v515 = vpop.f32.mrb[0].mxu0
    %v516 = vadd.f32 0.0, %v515
    %v517 = vpop.f32.mrb[0].mxu0
    %v518 = vadd.f32 0.0, %v517
    %519 = vmatprep.mubr.f32.mxu0 0.0
    %520 = vmatmul.mubr.f32.gmra.mrb[0].mxu0 %v174
    %v521 = vpop.f32.mrb[0].mxu0
    %v522 = vadd.f32 0.0, %v521
    %v523 = vpop.f32.mrb[0].mxu0
    %v524 = vadd.f32 0.0, %v523
    %525 = vmatprep.mubr.f32.mxu0 0.0
    %526 = vmatmul.mubr.f32.gmra.mrb[0].mxu0 %v177
    %v527 = vpop.f32.mrb[0].mxu0
    %v528 = vadd.f32 0.0, %v527
    %v529 = vpop.f32.mrb[0].mxu0
    %v530 = vadd.f32 0.0, %v529
    %531 = vdwg.mxu0
    %v532 = vmul.f32 %v342, 2.0
    %v533 = vmul.f32 %v344, 2.0
    %v534 = vmul.f32 %v348, 2.0
    %v535 = vmul.f32 %v350, 2.0
    %v536 = vmul.f32 %v354, 2.0
    %v537 = vmul.f32 %v356, 2.0
    %v538 = vmul.f32 %v360, 2.0
    %v539 = vmul.f32 %v362, 2.0
    %v540 = vmul.f32 %v366, 2.0
    %v541 = vmul.f32 %v368, 2.0
    %v542 = vmul.f32 %v372, 2.0
    %v543 = vmul.f32 %v374, 2.0
    %v544 = vmul.f32 %v378, 2.0
    %v545 = vmul.f32 %v380, 2.0
    %v546 = vmul.f32 %v384, 2.0
    %v547 = vmul.f32 %v386, 2.0
    %v548 = vmul.f32 %v390, 2.0
    %v549 = vmul.f32 %v392, 2.0
    %v550 = vmul.f32 %v396, 2.0
    %v551 = vmul.f32 %v398, 2.0
    %v552 = vmul.f32 %v402, 2.0
    %v553 = vmul.f32 %v404, 2.0
    %v554 = vmul.f32 %v408, 2.0
    %v555 = vmul.f32 %v410, 2.0
    %v556 = vmul.f32 %v414, 2.0
    %v557 = vmul.f32 %v416, 2.0
    %v558 = vmul.f32 %v420, 2.0
    %v559 = vmul.f32 %v422, 2.0
    %v560 = vmul.f32 %v426, 2.0
    %v561 = vmul.f32 %v428, 2.0
    %v562 = vmul.f32 %v432, 2.0
    %v563 = vmul.f32 %v434, 2.0
    %v564 = vmul.f32 %v438, 2.0
    %v565 = vmul.f32 %v440, 2.0
    %v566 = vmul.f32 %v444, 2.0
    %v567 = vmul.f32 %v446, 2.0
    %v568 = vmul.f32 %v450, 2.0
    %v569 = vmul.f32 %v452, 2.0
    %v570 = vmul.f32 %v456, 2.0
    %v571 = vmul.f32 %v458, 2.0
    %v572 = vmul.f32 %v462, 2.0
    %v573 = vmul.f32 %v464, 2.0
    %v574 = vmul.f32 %v468, 2.0
    %v575 = vmul.f32 %v470, 2.0
    %v576 = vmul.f32 %v474, 2.0
    %v577 = vmul.f32 %v476, 2.0
    %v578 = vmul.f32 %v480, 2.0
    %v579 = vmul.f32 %v482, 2.0
    %v580 = vmul.f32 %v486, 2.0
    %v581 = vmul.f32 %v488, 2.0
    %v582 = vmul.f32 %v492, 2.0
    %v583 = vmul.f32 %v494, 2.0
    %v584 = vmul.f32 %v498, 2.0
    %v585 = vmul.f32 %v500, 2.0
    %v586 = vmul.f32 %v504, 2.0
    %v587 = vmul.f32 %v506, 2.0
    %v588 = vmul.f32 %v510, 2.0
    %v589 = vmul.f32 %v512, 2.0
    %v590 = vmul.f32 %v516, 2.0
    %v591 = vmul.f32 %v518, 2.0
    %v592 = vmul.f32 %v522, 2.0
    %v593 = vmul.f32 %v524, 2.0
    %v594 = vmul.f32 %v528, 2.0
    %v595 = vmul.f32 %v530, 2.0
    %v597 = vlaneseq
    %v598 = vshrl.u32 %v597, 7
    %v599 = vsub.s32 0, %v598
    %v600 = vrot.slane %v81, %v599
    %v601 = vlaneseq
    %v602 = vshrl.u32 %v601, 7
    %v603 = vsub.s32 1, %v602
    %v604 = vrot.slane %v81, %v603
    %v607 = vsub.f32 %v600, %v532
    %v608 = vsub.f32 %v604, %v533
    %v609 = vsub.f32 %v600, %v534
    %v610 = vsub.f32 %v604, %v535
    %v611 = vsub.f32 %v600, %v536
    %v612 = vsub.f32 %v604, %v537
    %v613 = vsub.f32 %v600, %v538
    %v614 = vsub.f32 %v604, %v539
    %v615 = vsub.f32 %v600, %v540
    %v616 = vsub.f32 %v604, %v541
    %v617 = vsub.f32 %v600, %v542
    %v618 = vsub.f32 %v604, %v543
    %v619 = vsub.f32 %v600, %v544
    %v620 = vsub.f32 %v604, %v545
    %v621 = vsub.f32 %v600, %v546
    %v622 = vsub.f32 %v604, %v547
    %v623 = vsub.f32 %v600, %v548
    %v624 = vsub.f32 %v604, %v549
    %v625 = vsub.f32 %v600, %v550
    %v626 = vsub.f32 %v604, %v551
    %v627 = vsub.f32 %v600, %v552
    %v628 = vsub.f32 %v604, %v553
    %v629 = vsub.f32 %v600, %v554
    %v630 = vsub.f32 %v604, %v555
    %v631 = vsub.f32 %v600, %v556
    %v632 = vsub.f32 %v604, %v557
    %v633 = vsub.f32 %v600, %v558
    %v634 = vsub.f32 %v604, %v559
    %v635 = vsub.f32 %v600, %v560
    %v636 = vsub.f32 %v604, %v561
    %v637 = vsub.f32 %v600, %v562
    %v638 = vsub.f32 %v604, %v563
    %v639 = vsub.f32 %v600, %v564
    %v640 = vsub.f32 %v604, %v565
    %v641 = vsub.f32 %v600, %v566
    %v642 = vsub.f32 %v604, %v567
    %v643 = vsub.f32 %v600, %v568
    %v644 = vsub.f32 %v604, %v569
    %v645 = vsub.f32 %v600, %v570
    %v646 = vsub.f32 %v604, %v571
    %v647 = vsub.f32 %v600, %v572
    %v648 = vsub.f32 %v604, %v573
    %v649 = vsub.f32 %v600, %v574
    %v650 = vsub.f32 %v604, %v575
    %v651 = vsub.f32 %v600, %v576
    %v652 = vsub.f32 %v604, %v577
    %v653 = vsub.f32 %v600, %v578
    %v654 = vsub.f32 %v604, %v579
    %v655 = vsub.f32 %v600, %v580
    %v656 = vsub.f32 %v604, %v581
    %v657 = vsub.f32 %v600, %v582
    %v658 = vsub.f32 %v604, %v583
    %v659 = vsub.f32 %v600, %v584
    %v660 = vsub.f32 %v604, %v585
    %v661 = vsub.f32 %v600, %v586
    %v662 = vsub.f32 %v604, %v587
    %v663 = vsub.f32 %v600, %v588
    %v664 = vsub.f32 %v604, %v589
    %v665 = vsub.f32 %v600, %v590
    %v666 = vsub.f32 %v604, %v591
    %v667 = vsub.f32 %v600, %v592
    %v668 = vsub.f32 %v604, %v593
    %v669 = vsub.f32 %v600, %v594
    %v670 = vsub.f32 %v604, %v595
    %v671 = vmin.f32 %v607, %v608
    %672 = vmin.xlane.f32.xlu0 %v671
    %v673 = vpop.xlane.xlu0 %672
    %v674 = vmin.f32 %v609, %v610
    %675 = vmin.xlane.f32.xlu0 %v674
    %v676 = vpop.xlane.xlu0 %675
    %v677 = vmin.f32 %v611, %v612
    %678 = vmin.xlane.f32.xlu0 %v677
    %v679 = vpop.xlane.xlu0 %678
    %v680 = vmin.f32 %v613, %v614
    %681 = vmin.xlane.f32.xlu0 %v680
    %v682 = vpop.xlane.xlu0 %681
    %v683 = vmin.f32 %v615, %v616
    %684 = vmin.xlane.f32.xlu0 %v683
    %v685 = vpop.xlane.xlu0 %684
    %v686 = vmin.f32 %v617, %v618
    %687 = vmin.xlane.f32.xlu0 %v686
    %v688 = vpop.xlane.xlu0 %687
    %v689 = vmin.f32 %v619, %v620
    %690 = vmin.xlane.f32.xlu0 %v689
    %v691 = vpop.xlane.xlu0 %690
    %v692 = vmin.f32 %v621, %v622
    %693 = vmin.xlane.f32.xlu0 %v692
    %v694 = vpop.xlane.xlu0 %693
    %v695 = vmin.f32 %v623, %v624
    %696 = vmin.xlane.f32.xlu0 %v695
    %v697 = vpop.xlane.xlu0 %696
    %v698 = vmin.f32 %v625, %v626
    %699 = vmin.xlane.f32.xlu0 %v698
    %v700 = vpop.xlane.xlu0 %699
    %v701 = vmin.f32 %v627, %v628
    %702 = vmin.xlane.f32.xlu0 %v701
    %v703 = vpop.xlane.xlu0 %702
    %v704 = vmin.f32 %v629, %v630
    %705 = vmin.xlane.f32.xlu0 %v704
    %v706 = vpop.xlane.xlu0 %705
    %v707 = vmin.f32 %v631, %v632
    %708 = vmin.xlane.f32.xlu0 %v707
    %v709 = vpop.xlane.xlu0 %708
    %v710 = vmin.f32 %v633, %v634
    %711 = vmin.xlane.f32.xlu0 %v710
    %v712 = vpop.xlane.xlu0 %711
    %v713 = vmin.f32 %v635, %v636
    %714 = vmin.xlane.f32.xlu0 %v713
    %v715 = vpop.xlane.xlu0 %714
    %v716 = vmin.f32 %v637, %v638
    %717 = vmin.xlane.f32.xlu0 %v716
    %v718 = vpop.xlane.xlu0 %717
    %v719 = vmin.f32 %v639, %v640
    %720 = vmin.xlane.f32.xlu0 %v719
    %v721 = vpop.xlane.xlu0 %720
    %v722 = vmin.f32 %v641, %v642
    %723 = vmin.xlane.f32.xlu0 %v722
    %v724 = vpop.xlane.xlu0 %723
    %v725 = vmin.f32 %v643, %v644
    %726 = vmin.xlane.f32.xlu0 %v725
    %v727 = vpop.xlane.xlu0 %726
    %v728 = vmin.f32 %v645, %v646
    %729 = vmin.xlane.f32.xlu0 %v728
    %v730 = vpop.xlane.xlu0 %729
    %v731 = vmin.f32 %v647, %v648
    %732 = vmin.xlane.f32.xlu0 %v731
    %v733 = vpop.xlane.xlu0 %732
    %v734 = vmin.f32 %v649, %v650
    %735 = vmin.xlane.f32.xlu0 %v734
    %v736 = vpop.xlane.xlu0 %735
    %v737 = vmin.f32 %v651, %v652
    %738 = vmin.xlane.f32.xlu0 %v737
    %v739 = vpop.xlane.xlu0 %738
    %v740 = vmin.f32 %v653, %v654
    %741 = vmin.xlane.f32.xlu0 %v740
    %v742 = vpop.xlane.xlu0 %741
    %v743 = vmin.f32 %v655, %v656
    %744 = vmin.xlane.f32.xlu0 %v743
    %v745 = vpop.xlane.xlu0 %744
    %v746 = vmin.f32 %v657, %v658
    %747 = vmin.xlane.f32.xlu0 %v746
    %v748 = vpop.xlane.xlu0 %747
    %v749 = vmin.f32 %v659, %v660
    %750 = vmin.xlane.f32.xlu0 %v749
    %v751 = vpop.xlane.xlu0 %750
    %v752 = vmin.f32 %v661, %v662
    %753 = vmin.xlane.f32.xlu0 %v752
    %v754 = vpop.xlane.xlu0 %753
    %v755 = vmin.f32 %v663, %v664
    %756 = vmin.xlane.f32.xlu0 %v755
    %v757 = vpop.xlane.xlu0 %756
    %v758 = vmin.f32 %v665, %v666
    %759 = vmin.xlane.f32.xlu0 %v758
    %v760 = vpop.xlane.xlu0 %759
    %v761 = vmin.f32 %v667, %v668
    %762 = vmin.xlane.f32.xlu0 %v761
    %v763 = vpop.xlane.xlu0 %762
    %v764 = vmin.f32 %v669, %v670
    %765 = vmin.xlane.f32.xlu0 %v764
    %v766 = vpop.xlane.xlu0 %765
    %v767 = vlaneseq
    %v768 = vand.u32 %v767, 127
    %v769 = vadd.s32 %v768, 128
    %vm770 = vcmp.le.f32.partialorder %v607, %v673
    %vm771 = vcmp.le.f32.partialorder %v608, %v673
    %vm772 = vcmp.le.f32.partialorder %v609, %v676
    %vm773 = vcmp.le.f32.partialorder %v610, %v676
    %vm774 = vcmp.le.f32.partialorder %v611, %v679
    %vm775 = vcmp.le.f32.partialorder %v612, %v679
    %vm776 = vcmp.le.f32.partialorder %v613, %v682
    %vm777 = vcmp.le.f32.partialorder %v614, %v682
    %vm778 = vcmp.le.f32.partialorder %v615, %v685
    %vm779 = vcmp.le.f32.partialorder %v616, %v685
    %vm780 = vcmp.le.f32.partialorder %v617, %v688
    %vm781 = vcmp.le.f32.partialorder %v618, %v688
    %vm782 = vcmp.le.f32.partialorder %v619, %v691
    %vm783 = vcmp.le.f32.partialorder %v620, %v691
    %vm784 = vcmp.le.f32.partialorder %v621, %v694
    %vm785 = vcmp.le.f32.partialorder %v622, %v694
    %vm786 = vcmp.le.f32.partialorder %v623, %v697
    %vm787 = vcmp.le.f32.partialorder %v624, %v697
    %vm788 = vcmp.le.f32.partialorder %v625, %v700
    %vm789 = vcmp.le.f32.partialorder %v626, %v700
    %vm790 = vcmp.le.f32.partialorder %v627, %v703
    %vm791 = vcmp.le.f32.partialorder %v628, %v703
    %vm792 = vcmp.le.f32.partialorder %v629, %v706
    %vm793 = vcmp.le.f32.partialorder %v630, %v706
    %vm794 = vcmp.le.f32.partialorder %v631, %v709
    %vm795 = vcmp.le.f32.partialorder %v632, %v709
    %vm796 = vcmp.le.f32.partialorder %v633, %v712
    %vm797 = vcmp.le.f32.partialorder %v634, %v712
    %vm798 = vcmp.le.f32.partialorder %v635, %v715
    %vm799 = vcmp.le.f32.partialorder %v636, %v715
    %vm800 = vcmp.le.f32.partialorder %v637, %v718
    %vm801 = vcmp.le.f32.partialorder %v638, %v718
    %vm802 = vcmp.le.f32.partialorder %v639, %v721
    %vm803 = vcmp.le.f32.partialorder %v640, %v721
    %vm804 = vcmp.le.f32.partialorder %v641, %v724
    %vm805 = vcmp.le.f32.partialorder %v642, %v724
    %vm806 = vcmp.le.f32.partialorder %v643, %v727
    %vm807 = vcmp.le.f32.partialorder %v644, %v727
    %vm808 = vcmp.le.f32.partialorder %v645, %v730
    %vm809 = vcmp.le.f32.partialorder %v646, %v730
    %vm810 = vcmp.le.f32.partialorder %v647, %v733
    %vm811 = vcmp.le.f32.partialorder %v648, %v733
    %vm812 = vcmp.le.f32.partialorder %v649, %v736
    %vm813 = vcmp.le.f32.partialorder %v650, %v736
    %vm814 = vcmp.le.f32.partialorder %v651, %v739
    %vm815 = vcmp.le.f32.partialorder %v652, %v739
    %vm816 = vcmp.le.f32.partialorder %v653, %v742
    %vm817 = vcmp.le.f32.partialorder %v654, %v742
    %vm818 = vcmp.le.f32.partialorder %v655, %v745
    %vm819 = vcmp.le.f32.partialorder %v656, %v745
    %vm820 = vcmp.le.f32.partialorder %v657, %v748
    %vm821 = vcmp.le.f32.partialorder %v658, %v748
    %vm822 = vcmp.le.f32.partialorder %v659, %v751
    %vm823 = vcmp.le.f32.partialorder %v660, %v751
    %vm824 = vcmp.le.f32.partialorder %v661, %v754
    %vm825 = vcmp.le.f32.partialorder %v662, %v754
    %vm826 = vcmp.le.f32.partialorder %v663, %v757
    %vm827 = vcmp.le.f32.partialorder %v664, %v757
    %vm828 = vcmp.le.f32.partialorder %v665, %v760
    %vm829 = vcmp.le.f32.partialorder %v666, %v760
    %vm830 = vcmp.le.f32.partialorder %v667, %v763
    %vm831 = vcmp.le.f32.partialorder %v668, %v763
    %vm832 = vcmp.le.f32.partialorder %v669, %v766
    %vm833 = vcmp.le.f32.partialorder %v670, %v766
    %v834 = vsel %vm770, %v768, 256
    %v835 = vsel %vm771, %v769, 256
    %v836 = vsel %vm772, %v768, 256
    %v837 = vsel %vm773, %v769, 256
    %v838 = vsel %vm774, %v768, 256
    %v839 = vsel %vm775, %v769, 256
    %v840 = vsel %vm776, %v768, 256
    %v841 = vsel %vm777, %v769, 256
    %v842 = vsel %vm778, %v768, 256
    %v843 = vsel %vm779, %v769, 256
    %v844 = vsel %vm780, %v768, 256
    %v845 = vsel %vm781, %v769, 256
    %v846 = vsel %vm782, %v768, 256
    %v847 = vsel %vm783, %v769, 256
    %v848 = vsel %vm784, %v768, 256
    %v849 = vsel %vm785, %v769, 256
    %v850 = vsel %vm786, %v768, 256
    %v851 = vsel %vm787, %v769, 256
    %v852 = vsel %vm788, %v768, 256
    %v853 = vsel %vm789, %v769, 256
    %v854 = vsel %vm790, %v768, 256
    %v855 = vsel %vm791, %v769, 256
    %v856 = vsel %vm792, %v768, 256
    %v857 = vsel %vm793, %v769, 256
    %v858 = vsel %vm794, %v768, 256
    %v859 = vsel %vm795, %v769, 256
    %v860 = vsel %vm796, %v768, 256
    %v861 = vsel %vm797, %v769, 256
    %v862 = vsel %vm798, %v768, 256
    %v863 = vsel %vm799, %v769, 256
    %v864 = vsel %vm800, %v768, 256
    %v865 = vsel %vm801, %v769, 256
    %v866 = vsel %vm802, %v768, 256
    %v867 = vsel %vm803, %v769, 256
    %v868 = vsel %vm804, %v768, 256
    %v869 = vsel %vm805, %v769, 256
    %v870 = vsel %vm806, %v768, 256
    %v871 = vsel %vm807, %v769, 256
    %v872 = vsel %vm808, %v768, 256
    %v873 = vsel %vm809, %v769, 256
    %v874 = vsel %vm810, %v768, 256
    %v875 = vsel %vm811, %v769, 256
    %v876 = vsel %vm812, %v768, 256
    %v877 = vsel %vm813, %v769, 256
    %v878 = vsel %vm814, %v768, 256
    %v879 = vsel %vm815, %v769, 256
    %v880 = vsel %vm816, %v768, 256
    %v881 = vsel %vm817, %v769, 256
    %v882 = vsel %vm818, %v768, 256
    %v883 = vsel %vm819, %v769, 256
    %v884 = vsel %vm820, %v768, 256
    %v885 = vsel %vm821, %v769, 256
    %v886 = vsel %vm822, %v768, 256
    %v887 = vsel %vm823, %v769, 256
    %v888 = vsel %vm824, %v768, 256
    %v889 = vsel %vm825, %v769, 256
    %v890 = vsel %vm826, %v768, 256
    %v891 = vsel %vm827, %v769, 256
    %v892 = vsel %vm828, %v768, 256
    %v893 = vsel %vm829, %v769, 256
    %v894 = vsel %vm830, %v768, 256
    %v895 = vsel %vm831, %v769, 256
    %v896 = vsel %vm832, %v768, 256
    %v897 = vsel %vm833, %v769, 256
    %vm898 = vcmp.lt.s32.totalorder %v834, %v835
    %v899 = vsel %vm898, %v834, %v835
    %v900 = vand.u32 %v899, 65535
    %v901 = vshra.s32 %v899, 16
    %v902 = vcvt.s32.f32 %v900
    %v903 = vcvt.s32.f32 %v901
    %904 = vmin.xlane.f32.xlu0 %v903
    %v905 = vpop.xlane.xlu0 %904
    %vm906 = vcmp.eq.f32.partialorder %v903, %v905
    %v907 = vsel %vm906, %v902, inf
    %908 = vmin.xlane.f32.xlu0 %v907
    %v909 = vpop.xlane.xlu0 %908
    %v910 = vcvt.f32.s32 %v909
    %v911 = vcvt.f32.s32 %v905
    %v912 = vshll.u32 %v911, 16
    %v913 = vadd.s32 %v912, %v910
    %vm914 = vcmp.lt.s32.totalorder %v836, %v837
    %v915 = vsel %vm914, %v836, %v837
    %v916 = vand.u32 %v915, 65535
    %v917 = vshra.s32 %v915, 16
    %v918 = vcvt.s32.f32 %v916
    %v919 = vcvt.s32.f32 %v917
    %920 = vmin.xlane.f32.xlu0 %v919
    %v921 = vpop.xlane.xlu0 %920
    %vm922 = vcmp.eq.f32.partialorder %v919, %v921
    %v923 = vsel %vm922, %v918, inf
    %924 = vmin.xlane.f32.xlu0 %v923
    %v925 = vpop.xlane.xlu0 %924
    %v926 = vcvt.f32.s32 %v925
    %v927 = vcvt.f32.s32 %v921
    %v928 = vshll.u32 %v927, 16
    %v929 = vadd.s32 %v928, %v926
    %vm930 = vcmp.lt.s32.totalorder %v838, %v839
    %v931 = vsel %vm930, %v838, %v839
    %v932 = vand.u32 %v931, 65535
    %v933 = vshra.s32 %v931, 16
    %v934 = vcvt.s32.f32 %v932
    %v935 = vcvt.s32.f32 %v933
    %936 = vmin.xlane.f32.xlu0 %v935
    %v937 = vpop.xlane.xlu0 %936
    %vm938 = vcmp.eq.f32.partialorder %v935, %v937
    %v939 = vsel %vm938, %v934, inf
    %940 = vmin.xlane.f32.xlu0 %v939
    %v941 = vpop.xlane.xlu0 %940
    %v942 = vcvt.f32.s32 %v941
    %v943 = vcvt.f32.s32 %v937
    %v944 = vshll.u32 %v943, 16
    %v945 = vadd.s32 %v944, %v942
    %vm946 = vcmp.lt.s32.totalorder %v840, %v841
    %v947 = vsel %vm946, %v840, %v841
    %v948 = vand.u32 %v947, 65535
    %v949 = vshra.s32 %v947, 16
    %v950 = vcvt.s32.f32 %v948
    %v951 = vcvt.s32.f32 %v949
    %952 = vmin.xlane.f32.xlu0 %v951
    %v953 = vpop.xlane.xlu0 %952
    %vm954 = vcmp.eq.f32.partialorder %v951, %v953
    %v955 = vsel %vm954, %v950, inf
    %956 = vmin.xlane.f32.xlu0 %v955
    %v957 = vpop.xlane.xlu0 %956
    %v958 = vcvt.f32.s32 %v957
    %v959 = vcvt.f32.s32 %v953
    %v960 = vshll.u32 %v959, 16
    %v961 = vadd.s32 %v960, %v958
    %vm962 = vcmp.lt.s32.totalorder %v842, %v843
    %v963 = vsel %vm962, %v842, %v843
    %v964 = vand.u32 %v963, 65535
    %v965 = vshra.s32 %v963, 16
    %v966 = vcvt.s32.f32 %v964
    %v967 = vcvt.s32.f32 %v965
    %968 = vmin.xlane.f32.xlu0 %v967
    %v969 = vpop.xlane.xlu0 %968
    %vm970 = vcmp.eq.f32.partialorder %v967, %v969
    %v971 = vsel %vm970, %v966, inf
    %972 = vmin.xlane.f32.xlu0 %v971
    %v973 = vpop.xlane.xlu0 %972
    %v974 = vcvt.f32.s32 %v973
    %v975 = vcvt.f32.s32 %v969
    %v976 = vshll.u32 %v975, 16
    %v977 = vadd.s32 %v976, %v974
    %vm978 = vcmp.lt.s32.totalorder %v844, %v845
    %v979 = vsel %vm978, %v844, %v845
    %v980 = vand.u32 %v979, 65535
    %v981 = vshra.s32 %v979, 16
    %v982 = vcvt.s32.f32 %v980
    %v983 = vcvt.s32.f32 %v981
    %984 = vmin.xlane.f32.xlu0 %v983
    %v985 = vpop.xlane.xlu0 %984
    %vm986 = vcmp.eq.f32.partialorder %v983, %v985
    %v987 = vsel %vm986, %v982, inf
    %988 = vmin.xlane.f32.xlu0 %v987
    %v989 = vpop.xlane.xlu0 %988
    %v990 = vcvt.f32.s32 %v989
    %v991 = vcvt.f32.s32 %v985
    %v992 = vshll.u32 %v991, 16
    %v993 = vadd.s32 %v992, %v990
    %vm994 = vcmp.lt.s32.totalorder %v846, %v847
    %v995 = vsel %vm994, %v846, %v847
    %v996 = vand.u32 %v995, 65535
    %v997 = vshra.s32 %v995, 16
    %v998 = vcvt.s32.f32 %v996
    %v999 = vcvt.s32.f32 %v997
    %1000 = vmin.xlane.f32.xlu0 %v999
    %v1001 = vpop.xlane.xlu0 %1000
    %vm1002 = vcmp.eq.f32.partialorder %v999, %v1001
    %v1003 = vsel %vm1002, %v998, inf
    %1004 = vmin.xlane.f32.xlu0 %v1003
    %v1005 = vpop.xlane.xlu0 %1004
    %v1006 = vcvt.f32.s32 %v1005
    %v1007 = vcvt.f32.s32 %v1001
    %v1008 = vshll.u32 %v1007, 16
    %v1009 = vadd.s32 %v1008, %v1006
    %vm1010 = vcmp.lt.s32.totalorder %v848, %v849
    %v1011 = vsel %vm1010, %v848, %v849
    %v1012 = vand.u32 %v1011, 65535
    %v1013 = vshra.s32 %v1011, 16
    %v1014 = vcvt.s32.f32 %v1012
    %v1015 = vcvt.s32.f32 %v1013
    %1016 = vmin.xlane.f32.xlu0 %v1015
    %v1017 = vpop.xlane.xlu0 %1016
    %vm1018 = vcmp.eq.f32.partialorder %v1015, %v1017
    %v1019 = vsel %vm1018, %v1014, inf
    %1020 = vmin.xlane.f32.xlu0 %v1019
    %v1021 = vpop.xlane.xlu0 %1020
    %v1022 = vcvt.f32.s32 %v1021
    %v1023 = vcvt.f32.s32 %v1017
    %v1024 = vshll.u32 %v1023, 16
    %v1025 = vadd.s32 %v1024, %v1022
    %vm1026 = vcmp.lt.s32.totalorder %v850, %v851
    %v1027 = vsel %vm1026, %v850, %v851
    %v1028 = vand.u32 %v1027, 65535
    %v1029 = vshra.s32 %v1027, 16
    %v1030 = vcvt.s32.f32 %v1028
    %v1031 = vcvt.s32.f32 %v1029
    %1032 = vmin.xlane.f32.xlu0 %v1031
    %v1033 = vpop.xlane.xlu0 %1032
    %vm1034 = vcmp.eq.f32.partialorder %v1031, %v1033
    %v1035 = vsel %vm1034, %v1030, inf
    %1036 = vmin.xlane.f32.xlu0 %v1035
    %v1037 = vpop.xlane.xlu0 %1036
    %v1038 = vcvt.f32.s32 %v1037
    %v1039 = vcvt.f32.s32 %v1033
    %v1040 = vshll.u32 %v1039, 16
    %v1041 = vadd.s32 %v1040, %v1038
    %vm1042 = vcmp.lt.s32.totalorder %v852, %v853
    %v1043 = vsel %vm1042, %v852, %v853
    %v1044 = vand.u32 %v1043, 65535
    %v1045 = vshra.s32 %v1043, 16
    %v1046 = vcvt.s32.f32 %v1044
    %v1047 = vcvt.s32.f32 %v1045
    %1048 = vmin.xlane.f32.xlu0 %v1047
    %v1049 = vpop.xlane.xlu0 %1048
    %vm1050 = vcmp.eq.f32.partialorder %v1047, %v1049
    %v1051 = vsel %vm1050, %v1046, inf
    %1052 = vmin.xlane.f32.xlu0 %v1051
    %v1053 = vpop.xlane.xlu0 %1052
    %v1054 = vcvt.f32.s32 %v1053
    %v1055 = vcvt.f32.s32 %v1049
    %v1056 = vshll.u32 %v1055, 16
    %v1057 = vadd.s32 %v1056, %v1054
    %vm1058 = vcmp.lt.s32.totalorder %v854, %v855
    %v1059 = vsel %vm1058, %v854, %v855
    %v1060 = vand.u32 %v1059, 65535
    %v1061 = vshra.s32 %v1059, 16
    %v1062 = vcvt.s32.f32 %v1060
    %v1063 = vcvt.s32.f32 %v1061
    %1064 = vmin.xlane.f32.xlu0 %v1063
    %v1065 = vpop.xlane.xlu0 %1064
    %vm1066 = vcmp.eq.f32.partialorder %v1063, %v1065
    %v1067 = vsel %vm1066, %v1062, inf
    %1068 = vmin.xlane.f32.xlu0 %v1067
    %v1069 = vpop.xlane.xlu0 %1068
    %v1070 = vcvt.f32.s32 %v1069
    %v1071 = vcvt.f32.s32 %v1065
    %v1072 = vshll.u32 %v1071, 16
    %v1073 = vadd.s32 %v1072, %v1070
    %vm1074 = vcmp.lt.s32.totalorder %v856, %v857
    %v1075 = vsel %vm1074, %v856, %v857
    %v1076 = vand.u32 %v1075, 65535
    %v1077 = vshra.s32 %v1075, 16
    %v1078 = vcvt.s32.f32 %v1076
    %v1079 = vcvt.s32.f32 %v1077
    %1080 = vmin.xlane.f32.xlu0 %v1079
    %v1081 = vpop.xlane.xlu0 %1080
    %vm1082 = vcmp.eq.f32.partialorder %v1079, %v1081
    %v1083 = vsel %vm1082, %v1078, inf
    %1084 = vmin.xlane.f32.xlu0 %v1083
    %v1085 = vpop.xlane.xlu0 %1084
    %v1086 = vcvt.f32.s32 %v1085
    %v1087 = vcvt.f32.s32 %v1081
    %v1088 = vshll.u32 %v1087, 16
    %v1089 = vadd.s32 %v1088, %v1086
    %vm1090 = vcmp.lt.s32.totalorder %v858, %v859
    %v1091 = vsel %vm1090, %v858, %v859
    %v1092 = vand.u32 %v1091, 65535
    %v1093 = vshra.s32 %v1091, 16
    %v1094 = vcvt.s32.f32 %v1092
    %v1095 = vcvt.s32.f32 %v1093
    %1096 = vmin.xlane.f32.xlu0 %v1095
    %v1097 = vpop.xlane.xlu0 %1096
    %vm1098 = vcmp.eq.f32.partialorder %v1095, %v1097
    %v1099 = vsel %vm1098, %v1094, inf
    %1100 = vmin.xlane.f32.xlu0 %v1099
    %v1101 = vpop.xlane.xlu0 %1100
    %v1102 = vcvt.f32.s32 %v1101
    %v1103 = vcvt.f32.s32 %v1097
    %v1104 = vshll.u32 %v1103, 16
    %v1105 = vadd.s32 %v1104, %v1102
    %vm1106 = vcmp.lt.s32.totalorder %v860, %v861
    %v1107 = vsel %vm1106, %v860, %v861
    %v1108 = vand.u32 %v1107, 65535
    %v1109 = vshra.s32 %v1107, 16
    %v1110 = vcvt.s32.f32 %v1108
    %v1111 = vcvt.s32.f32 %v1109
    %1112 = vmin.xlane.f32.xlu0 %v1111
    %v1113 = vpop.xlane.xlu0 %1112
    %vm1114 = vcmp.eq.f32.partialorder %v1111, %v1113
    %v1115 = vsel %vm1114, %v1110, inf
    %1116 = vmin.xlane.f32.xlu0 %v1115
    %v1117 = vpop.xlane.xlu0 %1116
    %v1118 = vcvt.f32.s32 %v1117
    %v1119 = vcvt.f32.s32 %v1113
    %v1120 = vshll.u32 %v1119, 16
    %v1121 = vadd.s32 %v1120, %v1118
    %vm1122 = vcmp.lt.s32.totalorder %v862, %v863
    %v1123 = vsel %vm1122, %v862, %v863
    %v1124 = vand.u32 %v1123, 65535
    %v1125 = vshra.s32 %v1123, 16
    %v1126 = vcvt.s32.f32 %v1124
    %v1127 = vcvt.s32.f32 %v1125
    %1128 = vmin.xlane.f32.xlu0 %v1127
    %v1129 = vpop.xlane.xlu0 %1128
    %vm1130 = vcmp.eq.f32.partialorder %v1127, %v1129
    %v1131 = vsel %vm1130, %v1126, inf
    %1132 = vmin.xlane.f32.xlu0 %v1131
    %v1133 = vpop.xlane.xlu0 %1132
    %v1134 = vcvt.f32.s32 %v1133
    %v1135 = vcvt.f32.s32 %v1129
    %v1136 = vshll.u32 %v1135, 16
    %v1137 = vadd.s32 %v1136, %v1134
    %vm1138 = vcmp.lt.s32.totalorder %v864, %v865
    %v1139 = vsel %vm1138, %v864, %v865
    %v1140 = vand.u32 %v1139, 65535
    %v1141 = vshra.s32 %v1139, 16
    %v1142 = vcvt.s32.f32 %v1140
    %v1143 = vcvt.s32.f32 %v1141
    %1144 = vmin.xlane.f32.xlu0 %v1143
    %v1145 = vpop.xlane.xlu0 %1144
    %vm1146 = vcmp.eq.f32.partialorder %v1143, %v1145
    %v1147 = vsel %vm1146, %v1142, inf
    %1148 = vmin.xlane.f32.xlu0 %v1147
    %v1149 = vpop.xlane.xlu0 %1148
    %v1150 = vcvt.f32.s32 %v1149
    %v1151 = vcvt.f32.s32 %v1145
    %v1152 = vshll.u32 %v1151, 16
    %v1153 = vadd.s32 %v1152, %v1150
    %vm1154 = vcmp.lt.s32.totalorder %v866, %v867
    %v1155 = vsel %vm1154, %v866, %v867
    %v1156 = vand.u32 %v1155, 65535
    %v1157 = vshra.s32 %v1155, 16
    %v1158 = vcvt.s32.f32 %v1156
    %v1159 = vcvt.s32.f32 %v1157
    %1160 = vmin.xlane.f32.xlu0 %v1159
    %v1161 = vpop.xlane.xlu0 %1160
    %vm1162 = vcmp.eq.f32.partialorder %v1159, %v1161
    %v1163 = vsel %vm1162, %v1158, inf
    %1164 = vmin.xlane.f32.xlu0 %v1163
    %v1165 = vpop.xlane.xlu0 %1164
    %v1166 = vcvt.f32.s32 %v1165
    %v1167 = vcvt.f32.s32 %v1161
    %v1168 = vshll.u32 %v1167, 16
    %v1169 = vadd.s32 %v1168, %v1166
    %vm1170 = vcmp.lt.s32.totalorder %v868, %v869
    %v1171 = vsel %vm1170, %v868, %v869
    %v1172 = vand.u32 %v1171, 65535
    %v1173 = vshra.s32 %v1171, 16
    %v1174 = vcvt.s32.f32 %v1172
    %v1175 = vcvt.s32.f32 %v1173
    %1176 = vmin.xlane.f32.xlu0 %v1175
    %v1177 = vpop.xlane.xlu0 %1176
    %vm1178 = vcmp.eq.f32.partialorder %v1175, %v1177
    %v1179 = vsel %vm1178, %v1174, inf
    %1180 = vmin.xlane.f32.xlu0 %v1179
    %v1181 = vpop.xlane.xlu0 %1180
    %v1182 = vcvt.f32.s32 %v1181
    %v1183 = vcvt.f32.s32 %v1177
    %v1184 = vshll.u32 %v1183, 16
    %v1185 = vadd.s32 %v1184, %v1182
    %vm1186 = vcmp.lt.s32.totalorder %v870, %v871
    %v1187 = vsel %vm1186, %v870, %v871
    %v1188 = vand.u32 %v1187, 65535
    %v1189 = vshra.s32 %v1187, 16
    %v1190 = vcvt.s32.f32 %v1188
    %v1191 = vcvt.s32.f32 %v1189
    %1192 = vmin.xlane.f32.xlu0 %v1191
    %v1193 = vpop.xlane.xlu0 %1192
    %vm1194 = vcmp.eq.f32.partialorder %v1191, %v1193
    %v1195 = vsel %vm1194, %v1190, inf
    %1196 = vmin.xlane.f32.xlu0 %v1195
    %v1197 = vpop.xlane.xlu0 %1196
    %v1198 = vcvt.f32.s32 %v1197
    %v1199 = vcvt.f32.s32 %v1193
    %v1200 = vshll.u32 %v1199, 16
    %v1201 = vadd.s32 %v1200, %v1198
    %vm1202 = vcmp.lt.s32.totalorder %v872, %v873
    %v1203 = vsel %vm1202, %v872, %v873
    %v1204 = vand.u32 %v1203, 65535
    %v1205 = vshra.s32 %v1203, 16
    %v1206 = vcvt.s32.f32 %v1204
    %v1207 = vcvt.s32.f32 %v1205
    %1208 = vmin.xlane.f32.xlu0 %v1207
    %v1209 = vpop.xlane.xlu0 %1208
    %vm1210 = vcmp.eq.f32.partialorder %v1207, %v1209
    %v1211 = vsel %vm1210, %v1206, inf
    %1212 = vmin.xlane.f32.xlu0 %v1211
    %v1213 = vpop.xlane.xlu0 %1212
    %v1214 = vcvt.f32.s32 %v1213
    %v1215 = vcvt.f32.s32 %v1209
    %v1216 = vshll.u32 %v1215, 16
    %v1217 = vadd.s32 %v1216, %v1214
    %vm1218 = vcmp.lt.s32.totalorder %v874, %v875
    %v1219 = vsel %vm1218, %v874, %v875
    %v1220 = vand.u32 %v1219, 65535
    %v1221 = vshra.s32 %v1219, 16
    %v1222 = vcvt.s32.f32 %v1220
    %v1223 = vcvt.s32.f32 %v1221
    %1224 = vmin.xlane.f32.xlu0 %v1223
    %v1225 = vpop.xlane.xlu0 %1224
    %vm1226 = vcmp.eq.f32.partialorder %v1223, %v1225
    %v1227 = vsel %vm1226, %v1222, inf
    %1228 = vmin.xlane.f32.xlu0 %v1227
    %v1229 = vpop.xlane.xlu0 %1228
    %v1230 = vcvt.f32.s32 %v1229
    %v1231 = vcvt.f32.s32 %v1225
    %v1232 = vshll.u32 %v1231, 16
    %v1233 = vadd.s32 %v1232, %v1230
    %vm1234 = vcmp.lt.s32.totalorder %v876, %v877
    %v1235 = vsel %vm1234, %v876, %v877
    %v1236 = vand.u32 %v1235, 65535
    %v1237 = vshra.s32 %v1235, 16
    %v1238 = vcvt.s32.f32 %v1236
    %v1239 = vcvt.s32.f32 %v1237
    %1240 = vmin.xlane.f32.xlu0 %v1239
    %v1241 = vpop.xlane.xlu0 %1240
    %vm1242 = vcmp.eq.f32.partialorder %v1239, %v1241
    %v1243 = vsel %vm1242, %v1238, inf
    %1244 = vmin.xlane.f32.xlu0 %v1243
    %v1245 = vpop.xlane.xlu0 %1244
    %v1246 = vcvt.f32.s32 %v1245
    %v1247 = vcvt.f32.s32 %v1241
    %v1248 = vshll.u32 %v1247, 16
    %v1249 = vadd.s32 %v1248, %v1246
    %vm1250 = vcmp.lt.s32.totalorder %v878, %v879
    %v1251 = vsel %vm1250, %v878, %v879
    %v1252 = vand.u32 %v1251, 65535
    %v1253 = vshra.s32 %v1251, 16
    %v1254 = vcvt.s32.f32 %v1252
    %v1255 = vcvt.s32.f32 %v1253
    %1256 = vmin.xlane.f32.xlu0 %v1255
    %v1257 = vpop.xlane.xlu0 %1256
    %vm1258 = vcmp.eq.f32.partialorder %v1255, %v1257
    %v1259 = vsel %vm1258, %v1254, inf
    %1260 = vmin.xlane.f32.xlu0 %v1259
    %v1261 = vpop.xlane.xlu0 %1260
    %v1262 = vcvt.f32.s32 %v1261
    %v1263 = vcvt.f32.s32 %v1257
    %v1264 = vshll.u32 %v1263, 16
    %v1265 = vadd.s32 %v1264, %v1262
    %vm1266 = vcmp.lt.s32.totalorder %v880, %v881
    %v1267 = vsel %vm1266, %v880, %v881
    %v1268 = vand.u32 %v1267, 65535
    %v1269 = vshra.s32 %v1267, 16
    %v1270 = vcvt.s32.f32 %v1268
    %v1271 = vcvt.s32.f32 %v1269
    %1272 = vmin.xlane.f32.xlu0 %v1271
    %v1273 = vpop.xlane.xlu0 %1272
    %vm1274 = vcmp.eq.f32.partialorder %v1271, %v1273
    %v1275 = vsel %vm1274, %v1270, inf
    %1276 = vmin.xlane.f32.xlu0 %v1275
    %v1277 = vpop.xlane.xlu0 %1276
    %v1278 = vcvt.f32.s32 %v1277
    %v1279 = vcvt.f32.s32 %v1273
    %v1280 = vshll.u32 %v1279, 16
    %v1281 = vadd.s32 %v1280, %v1278
    %vm1282 = vcmp.lt.s32.totalorder %v882, %v883
    %v1283 = vsel %vm1282, %v882, %v883
    %v1284 = vand.u32 %v1283, 65535
    %v1285 = vshra.s32 %v1283, 16
    %v1286 = vcvt.s32.f32 %v1284
    %v1287 = vcvt.s32.f32 %v1285
    %1288 = vmin.xlane.f32.xlu0 %v1287
    %v1289 = vpop.xlane.xlu0 %1288
    %vm1290 = vcmp.eq.f32.partialorder %v1287, %v1289
    %v1291 = vsel %vm1290, %v1286, inf
    %1292 = vmin.xlane.f32.xlu0 %v1291
    %v1293 = vpop.xlane.xlu0 %1292
    %v1294 = vcvt.f32.s32 %v1293
    %v1295 = vcvt.f32.s32 %v1289
    %v1296 = vshll.u32 %v1295, 16
    %v1297 = vadd.s32 %v1296, %v1294
    %vm1298 = vcmp.lt.s32.totalorder %v884, %v885
    %v1299 = vsel %vm1298, %v884, %v885
    %v1300 = vand.u32 %v1299, 65535
    %v1301 = vshra.s32 %v1299, 16
    %v1302 = vcvt.s32.f32 %v1300
    %v1303 = vcvt.s32.f32 %v1301
    %1304 = vmin.xlane.f32.xlu0 %v1303
    %v1305 = vpop.xlane.xlu0 %1304
    %vm1306 = vcmp.eq.f32.partialorder %v1303, %v1305
    %v1307 = vsel %vm1306, %v1302, inf
    %1308 = vmin.xlane.f32.xlu0 %v1307
    %v1309 = vpop.xlane.xlu0 %1308
    %v1310 = vcvt.f32.s32 %v1309
    %v1311 = vcvt.f32.s32 %v1305
    %v1312 = vshll.u32 %v1311, 16
    %v1313 = vadd.s32 %v1312, %v1310
    %vm1314 = vcmp.lt.s32.totalorder %v886, %v887
    %v1315 = vsel %vm1314, %v886, %v887
    %v1316 = vand.u32 %v1315, 65535
    %v1317 = vshra.s32 %v1315, 16
    %v1318 = vcvt.s32.f32 %v1316
    %v1319 = vcvt.s32.f32 %v1317
    %1320 = vmin.xlane.f32.xlu0 %v1319
    %v1321 = vpop.xlane.xlu0 %1320
    %vm1322 = vcmp.eq.f32.partialorder %v1319, %v1321
    %v1323 = vsel %vm1322, %v1318, inf
    %1324 = vmin.xlane.f32.xlu0 %v1323
    %v1325 = vpop.xlane.xlu0 %1324
    %v1326 = vcvt.f32.s32 %v1325
    %v1327 = vcvt.f32.s32 %v1321
    %v1328 = vshll.u32 %v1327, 16
    %v1329 = vadd.s32 %v1328, %v1326
    %vm1330 = vcmp.lt.s32.totalorder %v888, %v889
    %v1331 = vsel %vm1330, %v888, %v889
    %v1332 = vand.u32 %v1331, 65535
    %v1333 = vshra.s32 %v1331, 16
    %v1334 = vcvt.s32.f32 %v1332
    %v1335 = vcvt.s32.f32 %v1333
    %1336 = vmin.xlane.f32.xlu0 %v1335
    %v1337 = vpop.xlane.xlu0 %1336
    %vm1338 = vcmp.eq.f32.partialorder %v1335, %v1337
    %v1339 = vsel %vm1338, %v1334, inf
    %1340 = vmin.xlane.f32.xlu0 %v1339
    %v1341 = vpop.xlane.xlu0 %1340
    %v1342 = vcvt.f32.s32 %v1341
    %v1343 = vcvt.f32.s32 %v1337
    %v1344 = vshll.u32 %v1343, 16
    %v1345 = vadd.s32 %v1344, %v1342
    %vm1346 = vcmp.lt.s32.totalorder %v890, %v891
    %v1347 = vsel %vm1346, %v890, %v891
    %v1348 = vand.u32 %v1347, 65535
    %v1349 = vshra.s32 %v1347, 16
    %v1350 = vcvt.s32.f32 %v1348
    %v1351 = vcvt.s32.f32 %v1349
    %1352 = vmin.xlane.f32.xlu0 %v1351
    %v1353 = vpop.xlane.xlu0 %1352
    %vm1354 = vcmp.eq.f32.partialorder %v1351, %v1353
    %v1355 = vsel %vm1354, %v1350, inf
    %1356 = vmin.xlane.f32.xlu0 %v1355
    %v1357 = vpop.xlane.xlu0 %1356
    %v1358 = vcvt.f32.s32 %v1357
    %v1359 = vcvt.f32.s32 %v1353
    %v1360 = vshll.u32 %v1359, 16
    %v1361 = vadd.s32 %v1360, %v1358
    %vm1362 = vcmp.lt.s32.totalorder %v892, %v893
    %v1363 = vsel %vm1362, %v892, %v893
    %v1364 = vand.u32 %v1363, 65535
    %v1365 = vshra.s32 %v1363, 16
    %v1366 = vcvt.s32.f32 %v1364
    %v1367 = vcvt.s32.f32 %v1365
    %1368 = vmin.xlane.f32.xlu0 %v1367
    %v1369 = vpop.xlane.xlu0 %1368
    %vm1370 = vcmp.eq.f32.partialorder %v1367, %v1369
    %v1371 = vsel %vm1370, %v1366, inf
    %1372 = vmin.xlane.f32.xlu0 %v1371
    %v1373 = vpop.xlane.xlu0 %1372
    %v1374 = vcvt.f32.s32 %v1373
    %v1375 = vcvt.f32.s32 %v1369
    %v1376 = vshll.u32 %v1375, 16
    %v1377 = vadd.s32 %v1376, %v1374
    %vm1378 = vcmp.lt.s32.totalorder %v894, %v895
    %v1379 = vsel %vm1378, %v894, %v895
    %v1380 = vand.u32 %v1379, 65535
    %v1381 = vshra.s32 %v1379, 16
    %v1382 = vcvt.s32.f32 %v1380
    %v1383 = vcvt.s32.f32 %v1381
    %1384 = vmin.xlane.f32.xlu0 %v1383
    %v1385 = vpop.xlane.xlu0 %1384
    %vm1386 = vcmp.eq.f32.partialorder %v1383, %v1385
    %v1387 = vsel %vm1386, %v1382, inf
    %1388 = vmin.xlane.f32.xlu0 %v1387
    %v1389 = vpop.xlane.xlu0 %1388
    %v1390 = vcvt.f32.s32 %v1389
    %v1391 = vcvt.f32.s32 %v1385
    %v1392 = vshll.u32 %v1391, 16
    %v1393 = vadd.s32 %v1392, %v1390
    %vm1394 = vcmp.lt.s32.totalorder %v896, %v897
    %v1395 = vsel %vm1394, %v896, %v897
    %v1396 = vand.u32 %v1395, 65535
    %v1397 = vshra.s32 %v1395, 16
    %v1398 = vcvt.s32.f32 %v1396
    %v1399 = vcvt.s32.f32 %v1397
    %1400 = vmin.xlane.f32.xlu0 %v1399
    %v1401 = vpop.xlane.xlu0 %1400
    %vm1402 = vcmp.eq.f32.partialorder %v1399, %v1401
    %v1403 = vsel %vm1402, %v1398, inf
    %1404 = vmin.xlane.f32.xlu0 %v1403
    %v1405 = vpop.xlane.xlu0 %1404
    %v1406 = vcvt.f32.s32 %v1405
    %v1407 = vcvt.f32.s32 %v1401
    %v1408 = vshll.u32 %v1407, 16
    %v1409 = vadd.s32 %v1408, %v1406
    %vm1410 = vcmp.eq.s32.totalorder %v768, %v913
    %vm1411 = vcmp.eq.s32.totalorder %v769, %v913
    %vm1412 = vcmp.eq.s32.totalorder %v768, %v929
    %vm1413 = vcmp.eq.s32.totalorder %v769, %v929
    %vm1414 = vcmp.eq.s32.totalorder %v768, %v945
    %vm1415 = vcmp.eq.s32.totalorder %v769, %v945
    %vm1416 = vcmp.eq.s32.totalorder %v768, %v961
    %vm1417 = vcmp.eq.s32.totalorder %v769, %v961
    %vm1418 = vcmp.eq.s32.totalorder %v768, %v977
    %vm1419 = vcmp.eq.s32.totalorder %v769, %v977
    %vm1420 = vcmp.eq.s32.totalorder %v768, %v993
    %vm1421 = vcmp.eq.s32.totalorder %v769, %v993
    %vm1422 = vcmp.eq.s32.totalorder %v768, %v1009
    %vm1423 = vcmp.eq.s32.totalorder %v769, %v1009
    %vm1424 = vcmp.eq.s32.totalorder %v768, %v1025
    %vm1425 = vcmp.eq.s32.totalorder %v769, %v1025
    %vm1426 = vcmp.eq.s32.totalorder %v768, %v1041
    %vm1427 = vcmp.eq.s32.totalorder %v769, %v1041
    %vm1428 = vcmp.eq.s32.totalorder %v768, %v1057
    %vm1429 = vcmp.eq.s32.totalorder %v769, %v1057
    %vm1430 = vcmp.eq.s32.totalorder %v768, %v1073
    %vm1431 = vcmp.eq.s32.totalorder %v769, %v1073
    %vm1432 = vcmp.eq.s32.totalorder %v768, %v1089
    %vm1433 = vcmp.eq.s32.totalorder %v769, %v1089
    %vm1434 = vcmp.eq.s32.totalorder %v768, %v1105
    %vm1435 = vcmp.eq.s32.totalorder %v769, %v1105
    %vm1436 = vcmp.eq.s32.totalorder %v768, %v1121
    %vm1437 = vcmp.eq.s32.totalorder %v769, %v1121
    %vm1438 = vcmp.eq.s32.totalorder %v768, %v1137
    %vm1439 = vcmp.eq.s32.totalorder %v769, %v1137
    %vm1440 = vcmp.eq.s32.totalorder %v768, %v1153
    %vm1441 = vcmp.eq.s32.totalorder %v769, %v1153
    %vm1442 = vcmp.eq.s32.totalorder %v768, %v1169
    %vm1443 = vcmp.eq.s32.totalorder %v769, %v1169
    %vm1444 = vcmp.eq.s32.totalorder %v768, %v1185
    %vm1445 = vcmp.eq.s32.totalorder %v769, %v1185
    %vm1446 = vcmp.eq.s32.totalorder %v768, %v1201
    %vm1447 = vcmp.eq.s32.totalorder %v769, %v1201
    %vm1448 = vcmp.eq.s32.totalorder %v768, %v1217
    %vm1449 = vcmp.eq.s32.totalorder %v769, %v1217
    %vm1450 = vcmp.eq.s32.totalorder %v768, %v1233
    %vm1451 = vcmp.eq.s32.totalorder %v769, %v1233
    %vm1452 = vcmp.eq.s32.totalorder %v768, %v1249
    %vm1453 = vcmp.eq.s32.totalorder %v769, %v1249
    %vm1454 = vcmp.eq.s32.totalorder %v768, %v1265
    %vm1455 = vcmp.eq.s32.totalorder %v769, %v1265
    %vm1456 = vcmp.eq.s32.totalorder %v768, %v1281
    %vm1457 = vcmp.eq.s32.totalorder %v769, %v1281
    %vm1458 = vcmp.eq.s32.totalorder %v768, %v1297
    %vm1459 = vcmp.eq.s32.totalorder %v769, %v1297
    %vm1460 = vcmp.eq.s32.totalorder %v768, %v1313
    %vm1461 = vcmp.eq.s32.totalorder %v769, %v1313
    %vm1462 = vcmp.eq.s32.totalorder %v768, %v1329
    %vm1463 = vcmp.eq.s32.totalorder %v769, %v1329
    %vm1464 = vcmp.eq.s32.totalorder %v768, %v1345
    %vm1465 = vcmp.eq.s32.totalorder %v769, %v1345
    %vm1466 = vcmp.eq.s32.totalorder %v768, %v1361
    %vm1467 = vcmp.eq.s32.totalorder %v769, %v1361
    %vm1468 = vcmp.eq.s32.totalorder %v768, %v1377
    %vm1469 = vcmp.eq.s32.totalorder %v769, %v1377
    %vm1470 = vcmp.eq.s32.totalorder %v768, %v1393
    %vm1471 = vcmp.eq.s32.totalorder %v769, %v1393
    %vm1472 = vcmp.eq.s32.totalorder %v768, %v1409
    %vm1473 = vcmp.eq.s32.totalorder %v769, %v1409
    %v1474 = vsel %vm1410, 1, 0
    %v1475 = vsel %vm1411, 1, 0
    %v1476 = vsel %vm1412, 1, 0
    %v1477 = vsel %vm1413, 1, 0
    %v1478 = vsel %vm1414, 1, 0
    %v1479 = vsel %vm1415, 1, 0
    %v1480 = vsel %vm1416, 1, 0
    %v1481 = vsel %vm1417, 1, 0
    %v1482 = vsel %vm1418, 1, 0
    %v1483 = vsel %vm1419, 1, 0
    %v1484 = vsel %vm1420, 1, 0
    %v1485 = vsel %vm1421, 1, 0
    %v1486 = vsel %vm1422, 1, 0
    %v1487 = vsel %vm1423, 1, 0
    %v1488 = vsel %vm1424, 1, 0
    %v1489 = vsel %vm1425, 1, 0
    %v1490 = vsel %vm1426, 1, 0
    %v1491 = vsel %vm1427, 1, 0
    %v1492 = vsel %vm1428, 1, 0
    %v1493 = vsel %vm1429, 1, 0
    %v1494 = vsel %vm1430, 1, 0
    %v1495 = vsel %vm1431, 1, 0
    %v1496 = vsel %vm1432, 1, 0
    %v1497 = vsel %vm1433, 1, 0
    %v1498 = vsel %vm1434, 1, 0
    %v1499 = vsel %vm1435, 1, 0
    %v1500 = vsel %vm1436, 1, 0
    %v1501 = vsel %vm1437, 1, 0
    %v1502 = vsel %vm1438, 1, 0
    %v1503 = vsel %vm1439, 1, 0
    %v1504 = vsel %vm1440, 1, 0
    %v1505 = vsel %vm1441, 1, 0
    %v1506 = vsel %vm1442, 1, 0
    %v1507 = vsel %vm1443, 1, 0
    %v1508 = vsel %vm1444, 1, 0
    %v1509 = vsel %vm1445, 1, 0
    %v1510 = vsel %vm1446, 1, 0
    %v1511 = vsel %vm1447, 1, 0
    %v1512 = vsel %vm1448, 1, 0
    %v1513 = vsel %vm1449, 1, 0
    %v1514 = vsel %vm1450, 1, 0
    %v1515 = vsel %vm1451, 1, 0
    %v1516 = vsel %vm1452, 1, 0
    %v1517 = vsel %vm1453, 1, 0
    %v1518 = vsel %vm1454, 1, 0
    %v1519 = vsel %vm1455, 1, 0
    %v1520 = vsel %vm1456, 1, 0
    %v1521 = vsel %vm1457, 1, 0
    %v1522 = vsel %vm1458, 1, 0
    %v1523 = vsel %vm1459, 1, 0
    %v1524 = vsel %vm1460, 1, 0
    %v1525 = vsel %vm1461, 1, 0
    %v1526 = vsel %vm1462, 1, 0
    %v1527 = vsel %vm1463, 1, 0
    %v1528 = vsel %vm1464, 1, 0
    %v1529 = vsel %vm1465, 1, 0
    %v1530 = vsel %vm1466, 1, 0
    %v1531 = vsel %vm1467, 1, 0
    %v1532 = vsel %vm1468, 1, 0
    %v1533 = vsel %vm1469, 1, 0
    %v1534 = vsel %vm1470, 1, 0
    %v1535 = vsel %vm1471, 1, 0
    %v1536 = vsel %vm1472, 1, 0
    %v1537 = vsel %vm1473, 1, 0
    %v1538 = vcvt.s32.f32 %v1474
    %v1539 = vcvt.s32.f32 %v1475
    %v1540 = vcvt.s32.f32 %v1476
    %v1541 = vcvt.s32.f32 %v1477
    %v1542 = vcvt.s32.f32 %v1478
    %v1543 = vcvt.s32.f32 %v1479
    %v1544 = vcvt.s32.f32 %v1480
    %v1545 = vcvt.s32.f32 %v1481
    %v1546 = vcvt.s32.f32 %v1482
    %v1547 = vcvt.s32.f32 %v1483
    %v1548 = vcvt.s32.f32 %v1484
    %v1549 = vcvt.s32.f32 %v1485
    %v1550 = vcvt.s32.f32 %v1486
    %v1551 = vcvt.s32.f32 %v1487
    %v1552 = vcvt.s32.f32 %v1488
    %v1553 = vcvt.s32.f32 %v1489
    %v1554 = vcvt.s32.f32 %v1490
    %v1555 = vcvt.s32.f32 %v1491
    %v1556 = vcvt.s32.f32 %v1492
    %v1557 = vcvt.s32.f32 %v1493
    %v1558 = vcvt.s32.f32 %v1494
    %v1559 = vcvt.s32.f32 %v1495
    %v1560 = vcvt.s32.f32 %v1496
    %v1561 = vcvt.s32.f32 %v1497
    %v1562 = vcvt.s32.f32 %v1498
    %v1563 = vcvt.s32.f32 %v1499
    %v1564 = vcvt.s32.f32 %v1500
    %v1565 = vcvt.s32.f32 %v1501
    %v1566 = vcvt.s32.f32 %v1502
    %v1567 = vcvt.s32.f32 %v1503
    %v1568 = vcvt.s32.f32 %v1504
    %v1569 = vcvt.s32.f32 %v1505
    %v1570 = vcvt.s32.f32 %v1506
    %v1571 = vcvt.s32.f32 %v1507
    %v1572 = vcvt.s32.f32 %v1508
    %v1573 = vcvt.s32.f32 %v1509
    %v1574 = vcvt.s32.f32 %v1510
    %v1575 = vcvt.s32.f32 %v1511
    %v1576 = vcvt.s32.f32 %v1512
    %v1577 = vcvt.s32.f32 %v1513
    %v1578 = vcvt.s32.f32 %v1514
    %v1579 = vcvt.s32.f32 %v1515
    %v1580 = vcvt.s32.f32 %v1516
    %v1581 = vcvt.s32.f32 %v1517
    %v1582 = vcvt.s32.f32 %v1518
    %v1583 = vcvt.s32.f32 %v1519
    %v1584 = vcvt.s32.f32 %v1520
    %v1585 = vcvt.s32.f32 %v1521
    %v1586 = vcvt.s32.f32 %v1522
    %v1587 = vcvt.s32.f32 %v1523
    %v1588 = vcvt.s32.f32 %v1524
    %v1589 = vcvt.s32.f32 %v1525
    %v1590 = vcvt.s32.f32 %v1526
    %v1591 = vcvt.s32.f32 %v1527
    %v1592 = vcvt.s32.f32 %v1528
    %v1593 = vcvt.s32.f32 %v1529
    %v1594 = vcvt.s32.f32 %v1530
    %v1595 = vcvt.s32.f32 %v1531
    %v1596 = vcvt.s32.f32 %v1532
    %v1597 = vcvt.s32.f32 %v1533
    %v1598 = vcvt.s32.f32 %v1534
    %v1599 = vcvt.s32.f32 %v1535
    %v1600 = vcvt.s32.f32 %v1536
    %v1601 = vcvt.s32.f32 %v1537
    %1602 = vmatprep.subr.mxu0 0.0
    %1603 = vmatpush1.msra.mxu0 %v49
    %1604 = vmatprep.subr.mxu0 0.0
    %1605 = vmatpush1.msra.mxu0 %v50
    %1606 = vmatprep.subr.mxu0 0.0
    %1607 = vmatpush1.msra.mxu0 %v51
    %1608 = vmatprep.subr.mxu0 0.0
    %1609 = vmatpush1.msra.mxu0 %v52
    %1610 = vmatprep.subr.mxu0 0.0
    %1611 = vmatpush1.msra.mxu0 %v53
    %1612 = vmatprep.subr.mxu0 0.0
    %1613 = vmatpush1.msra.mxu0 %v54
    %1614 = vmatprep.subr.mxu0 0.0
    %1615 = vmatpush1.msra.mxu0 %v55
    %1616 = vmatprep.subr.mxu0 0.0
    %1617 = vmatpush1.msra.mxu0 %v56
    %1618 = vmatprep.subr.mxu0 0.0
    %1619 = vmatpush1.msra.mxu0 %v57
    %1620 = vmatprep.subr.mxu0 0.0
    %1621 = vmatpush1.msra.mxu0 %v58
    %1622 = vmatprep.subr.mxu0 0.0
    %1623 = vmatpush1.msra.mxu0 %v59
    %1624 = vmatprep.subr.mxu0 0.0
    %1625 = vmatpush1.msra.mxu0 %v60
    %1626 = vmatprep.subr.mxu0 0.0
    %1627 = vmatpush1.msra.mxu0 %v61
    %1628 = vmatprep.subr.mxu0 0.0
    %1629 = vmatpush1.msra.mxu0 %v62
    %1630 = vmatprep.subr.mxu0 0.0
    %1631 = vmatpush1.msra.mxu0 %v63
    %1632 = vmatprep.subr.mxu0 0.0
    %1633 = vmatpush1.msra.mxu0 %v64
    %1634 = vmatprep.subr.mxu0 0.0
    %1635 = vmatpush1.msra.mxu0 %v65
    %1636 = vmatprep.subr.mxu0 0.0
    %1637 = vmatpush1.msra.mxu0 %v66
    %1638 = vmatprep.subr.mxu0 0.0
    %1639 = vmatpush1.msra.mxu0 %v67
    %1640 = vmatprep.subr.mxu0 0.0
    %1641 = vmatpush1.msra.mxu0 %v68
    %1642 = vmatprep.subr.mxu0 0.0
    %1643 = vmatpush1.msra.mxu0 %v69
    %1644 = vmatprep.subr.mxu0 0.0
    %1645 = vmatpush1.msra.mxu0 %v70
    %1646 = vmatprep.subr.mxu0 0.0
    %1647 = vmatpush1.msra.mxu0 %v71
    %1648 = vmatprep.subr.mxu0 0.0
    %1649 = vmatpush1.msra.mxu0 %v72
    %1650 = vmatprep.subr.mxu0 0.0
    %1651 = vmatpush1.msra.mxu0 %v73
    %1652 = vmatprep.subr.mxu0 0.0
    %1653 = vmatpush1.msra.mxu0 %v74
    %1654 = vmatprep.subr.mxu0 0.0
    %1655 = vmatpush1.msra.mxu0 %v75
    %1656 = vmatprep.subr.mxu0 0.0
    %1657 = vmatpush1.msra.mxu0 %v76
    %1658 = vmatprep.subr.mxu0 0.0
    %1659 = vmatpush1.msra.mxu0 %v77
    %1660 = vmatprep.subr.mxu0 0.0
    %1661 = vmatpush1.msra.mxu0 %v78
    %1662 = vmatprep.subr.mxu0 0.0
    %1663 = vmatpush1.msra.mxu0 %v79
    %1664 = vmatprep.subr.mxu0 0.0
    %1665 = vmatpush1.msra.mxu0 %v80
    %1666 = vmatprep.mubr.f32.mxu0 %v1539
    %1667 = vmatmul.mubr.f32.gmra.mrb[0].mxu0 %v1538
    %v1668 = vpop.f32.mrb[0].mxu0
    %v1669 = vadd.f32 0.0, %v1668
    %v1670 = vpop.f32.mrb[0].mxu0
    %1671 = vmatprep.mubr.f32.mxu0 %v1541
    %1672 = vmatmul.mubr.f32.gmra.mrb[0].mxu0 %v1540
    %v1673 = vpop.f32.mrb[0].mxu0
    %v1674 = vadd.f32 0.0, %v1673
    %v1675 = vpop.f32.mrb[0].mxu0
    %1676 = vmatprep.mubr.f32.mxu0 %v1543
    %1677 = vmatmul.mubr.f32.gmra.mrb[0].mxu0 %v1542
    %v1678 = vpop.f32.mrb[0].mxu0
    %v1679 = vadd.f32 0.0, %v1678
    %v1680 = vpop.f32.mrb[0].mxu0
    %1681 = vmatprep.mubr.f32.mxu0 %v1545
    %1682 = vmatmul.mubr.f32.gmra.mrb[0].mxu0 %v1544
    %v1683 = vpop.f32.mrb[0].mxu0
    %v1684 = vadd.f32 0.0, %v1683
    %v1685 = vpop.f32.mrb[0].mxu0
    %1686 = vmatprep.mubr.f32.mxu0 %v1547
    %1687 = vmatmul.mubr.f32.gmra.mrb[0].mxu0 %v1546
    %v1688 = vpop.f32.mrb[0].mxu0
    %v1689 = vadd.f32 0.0, %v1688
    %v1690 = vpop.f32.mrb[0].mxu0
    %1691 = vmatprep.mubr.f32.mxu0 %v1549
    %1692 = vmatmul.mubr.f32.gmra.mrb[0].mxu0 %v1548
    %v1693 = vpop.f32.mrb[0].mxu0
    %v1694 = vadd.f32 0.0, %v1693
    %v1695 = vpop.f32.mrb[0].mxu0
    %1696 = vmatprep.mubr.f32.mxu0 %v1551
    %1697 = vmatmul.mubr.f32.gmra.mrb[0].mxu0 %v1550
    %v1698 = vpop.f32.mrb[0].mxu0
    %v1699 = vadd.f32 0.0, %v1698
    %v1700 = vpop.f32.mrb[0].mxu0
    %1701 = vmatprep.mubr.f32.mxu0 %v1553
    %1702 = vmatmul.mubr.f32.gmra.mrb[0].mxu0 %v1552
    %v1703 = vpop.f32.mrb[0].mxu0
    %v1704 = vadd.f32 0.0, %v1703
    %v1705 = vpop.f32.mrb[0].mxu0
    %1706 = vmatprep.mubr.f32.mxu0 %v1555
    %1707 = vmatmul.mubr.f32.gmra.mrb[0].mxu0 %v1554
    %v1708 = vpop.f32.mrb[0].mxu0
    %v1709 = vadd.f32 0.0, %v1708
    %v1710 = vpop.f32.mrb[0].mxu0
    %1711 = vmatprep.mubr.f32.mxu0 %v1557
    %1712 = vmatmul.mubr.f32.gmra.mrb[0].mxu0 %v1556
    %v1713 = vpop.f32.mrb[0].mxu0
    %v1714 = vadd.f32 0.0, %v1713
    %v1715 = vpop.f32.mrb[0].mxu0
    %1716 = vmatprep.mubr.f32.mxu0 %v1559
    %1717 = vmatmul.mubr.f32.gmra.mrb[0].mxu0 %v1558
    %v1718 = vpop.f32.mrb[0].mxu0
    %v1719 = vadd.f32 0.0, %v1718
    %v1720 = vpop.f32.mrb[0].mxu0
    %1721 = vmatprep.mubr.f32.mxu0 %v1561
    %1722 = vmatmul.mubr.f32.gmra.mrb[0].mxu0 %v1560
    %v1723 = vpop.f32.mrb[0].mxu0
    %v1724 = vadd.f32 0.0, %v1723
    %v1725 = vpop.f32.mrb[0].mxu0
    %1726 = vmatprep.mubr.f32.mxu0 %v1563
    %1727 = vmatmul.mubr.f32.gmra.mrb[0].mxu0 %v1562
    %v1728 = vpop.f32.mrb[0].mxu0
    %v1729 = vadd.f32 0.0, %v1728
    %v1730 = vpop.f32.mrb[0].mxu0
    %1731 = vmatprep.mubr.f32.mxu0 %v1565
    %1732 = vmatmul.mubr.f32.gmra.mrb[0].mxu0 %v1564
    %v1733 = vpop.f32.mrb[0].mxu0
    %v1734 = vadd.f32 0.0, %v1733
    %v1735 = vpop.f32.mrb[0].mxu0
    %1736 = vmatprep.mubr.f32.mxu0 %v1567
    %1737 = vmatmul.mubr.f32.gmra.mrb[0].mxu0 %v1566
    %v1738 = vpop.f32.mrb[0].mxu0
    %v1739 = vadd.f32 0.0, %v1738
    %v1740 = vpop.f32.mrb[0].mxu0
    %1741 = vmatprep.mubr.f32.mxu0 %v1569
    %1742 = vmatmul.mubr.f32.gmra.mrb[0].mxu0 %v1568
    %v1743 = vpop.f32.mrb[0].mxu0
    %v1744 = vadd.f32 0.0, %v1743
    %v1745 = vpop.f32.mrb[0].mxu0
    %1746 = vmatprep.mubr.f32.mxu0 %v1571
    %1747 = vmatmul.mubr.f32.gmra.mrb[0].mxu0 %v1570
    %v1748 = vpop.f32.mrb[0].mxu0
    %v1749 = vadd.f32 0.0, %v1748
    %v1750 = vpop.f32.mrb[0].mxu0
    %1751 = vmatprep.mubr.f32.mxu0 %v1573
    %1752 = vmatmul.mubr.f32.gmra.mrb[0].mxu0 %v1572
    %v1753 = vpop.f32.mrb[0].mxu0
    %v1754 = vadd.f32 0.0, %v1753
    %v1755 = vpop.f32.mrb[0].mxu0
    %1756 = vmatprep.mubr.f32.mxu0 %v1575
    %1757 = vmatmul.mubr.f32.gmra.mrb[0].mxu0 %v1574
    %v1758 = vpop.f32.mrb[0].mxu0
    %v1759 = vadd.f32 0.0, %v1758
    %v1760 = vpop.f32.mrb[0].mxu0
    %1761 = vmatprep.mubr.f32.mxu0 %v1577
    %1762 = vmatmul.mubr.f32.gmra.mrb[0].mxu0 %v1576
    %v1763 = vpop.f32.mrb[0].mxu0
    %v1764 = vadd.f32 0.0, %v1763
    %v1765 = vpop.f32.mrb[0].mxu0
    %1766 = vmatprep.mubr.f32.mxu0 %v1579
    %1767 = vmatmul.mubr.f32.gmra.mrb[0].mxu0 %v1578
    %v1768 = vpop.f32.mrb[0].mxu0
    %v1769 = vadd.f32 0.0, %v1768
    %v1770 = vpop.f32.mrb[0].mxu0
    %1771 = vmatprep.mubr.f32.mxu0 %v1581
    %1772 = vmatmul.mubr.f32.gmra.mrb[0].mxu0 %v1580
    %v1773 = vpop.f32.mrb[0].mxu0
    %v1774 = vadd.f32 0.0, %v1773
    %v1775 = vpop.f32.mrb[0].mxu0
    %1776 = vmatprep.mubr.f32.mxu0 %v1583
    %1777 = vmatmul.mubr.f32.gmra.mrb[0].mxu0 %v1582
    %v1778 = vpop.f32.mrb[0].mxu0
    %v1779 = vadd.f32 0.0, %v1778
    %v1780 = vpop.f32.mrb[0].mxu0
    %1781 = vmatprep.mubr.f32.mxu0 %v1585
    %1782 = vmatmul.mubr.f32.gmra.mrb[0].mxu0 %v1584
    %v1783 = vpop.f32.mrb[0].mxu0
    %v1784 = vadd.f32 0.0, %v1783
    %v1785 = vpop.f32.mrb[0].mxu0
    %1786 = vmatprep.mubr.f32.mxu0 %v1587
    %1787 = vmatmul.mubr.f32.gmra.mrb[0].mxu0 %v1586
    %v1788 = vpop.f32.mrb[0].mxu0
    %v1789 = vadd.f32 0.0, %v1788
    %v1790 = vpop.f32.mrb[0].mxu0
    %1791 = vmatprep.mubr.f32.mxu0 %v1589
    %1792 = vmatmul.mubr.f32.gmra.mrb[0].mxu0 %v1588
    %v1793 = vpop.f32.mrb[0].mxu0
    %v1794 = vadd.f32 0.0, %v1793
    %v1795 = vpop.f32.mrb[0].mxu0
    %1796 = vmatprep.mubr.f32.mxu0 %v1591
    %1797 = vmatmul.mubr.f32.gmra.mrb[0].mxu0 %v1590
    %v1798 = vpop.f32.mrb[0].mxu0
    %v1799 = vadd.f32 0.0, %v1798
    %v1800 = vpop.f32.mrb[0].mxu0
    %1801 = vmatprep.mubr.f32.mxu0 %v1593
    %1802 = vmatmul.mubr.f32.gmra.mrb[0].mxu0 %v1592
    %v1803 = vpop.f32.mrb[0].mxu0
    %v1804 = vadd.f32 0.0, %v1803
    %v1805 = vpop.f32.mrb[0].mxu0
    %1806 = vmatprep.mubr.f32.mxu0 %v1595
    %1807 = vmatmul.mubr.f32.gmra.mrb[0].mxu0 %v1594
    %v1808 = vpop.f32.mrb[0].mxu0
    %v1809 = vadd.f32 0.0, %v1808
    %v1810 = vpop.f32.mrb[0].mxu0
    %1811 = vmatprep.mubr.f32.mxu0 %v1597
    %1812 = vmatmul.mubr.f32.gmra.mrb[0].mxu0 %v1596
    %v1813 = vpop.f32.mrb[0].mxu0
    %v1814 = vadd.f32 0.0, %v1813
    %v1815 = vpop.f32.mrb[0].mxu0
    %1816 = vmatprep.mubr.f32.mxu0 %v1599
    %1817 = vmatmul.mubr.f32.gmra.mrb[0].mxu0 %v1598
    %v1818 = vpop.f32.mrb[0].mxu0
    %v1819 = vadd.f32 0.0, %v1818
    %v1820 = vpop.f32.mrb[0].mxu0
    %1821 = vmatprep.mubr.f32.mxu0 %v1601
    %1822 = vmatmul.mubr.f32.gmra.mrb[0].mxu0 %v1600
    %v1823 = vpop.f32.mrb[0].mxu0
    %v1824 = vadd.f32 0.0, %v1823
    %v1825 = vpop.f32.mrb[0].mxu0
    %1826 = vdwg.mxu0
    %1827 = vst.msk [vmem:[%s3] sm:$0xff] %vm82, %v1669
    %1828 = vst.msk [vmem:[%s3 + $0x8] sm:$0xff] %vm82, %v1674
    %1829 = vst.msk [vmem:[%s3 + $0x10] sm:$0xff] %vm82, %v1679
    %1830 = vst.msk [vmem:[%s3 + $0x18] sm:$0xff] %vm82, %v1684
    %1831 = vst.msk [vmem:[%s3 + $0x20] sm:$0xff] %vm82, %v1689
    %1832 = vst.msk [vmem:[%s3 + $0x28] sm:$0xff] %vm82, %v1694
    %1833 = vst.msk [vmem:[%s3 + $0x30] sm:$0xff] %vm82, %v1699
    %1834 = vst.msk [vmem:[%s3 + $0x38] sm:$0xff] %vm82, %v1704
    %1835 = vst.msk [vmem:[%s3 + $0x40] sm:$0xff] %vm82, %v1709
    %1836 = vst.msk [vmem:[%s3 + $0x48] sm:$0xff] %vm82, %v1714
    %1837 = vst.msk [vmem:[%s3 + $0x50] sm:$0xff] %vm82, %v1719
    %1838 = vst.msk [vmem:[%s3 + $0x58] sm:$0xff] %vm82, %v1724
    %1839 = vst.msk [vmem:[%s3 + $0x60] sm:$0xff] %vm82, %v1729
    %1840 = vst.msk [vmem:[%s3 + $0x68] sm:$0xff] %vm82, %v1734
    %1841 = vst.msk [vmem:[%s3 + $0x70] sm:$0xff] %vm82, %v1739
    %1842 = vst.msk [vmem:[%s3 + $0x78] sm:$0xff] %vm82, %v1744
    %1843 = vst.msk [vmem:[%s3 + $0x80] sm:$0xff] %vm82, %v1749
    %1844 = vst.msk [vmem:[%s3 + $0x88] sm:$0xff] %vm82, %v1754
    %1845 = vst.msk [vmem:[%s3 + $0x90] sm:$0xff] %vm82, %v1759
    %1846 = vst.msk [vmem:[%s3 + $0x98] sm:$0xff] %vm82, %v1764
    %1847 = vst.msk [vmem:[%s3 + $0xa0] sm:$0xff] %vm82, %v1769
    %1848 = vst.msk [vmem:[%s3 + $0xa8] sm:$0xff] %vm82, %v1774
    %1849 = vst.msk [vmem:[%s3 + $0xb0] sm:$0xff] %vm82, %v1779
    %1850 = vst.msk [vmem:[%s3 + $0xb8] sm:$0xff] %vm82, %v1784
    %1851 = vst.msk [vmem:[%s3 + $0xc0] sm:$0xff] %vm82, %v1789
    %1852 = vst.msk [vmem:[%s3 + $0xc8] sm:$0xff] %vm82, %v1794
    %1853 = vst.msk [vmem:[%s3 + $0xd0] sm:$0xff] %vm82, %v1799
    %1854 = vst.msk [vmem:[%s3 + $0xd8] sm:$0xff] %vm82, %v1804
    %1855 = vst.msk [vmem:[%s3 + $0xe0] sm:$0xff] %vm82, %v1809
    %1856 = vst.msk [vmem:[%s3 + $0xe8] sm:$0xff] %vm82, %v1814
    %1857 = vst.msk [vmem:[%s3 + $0xf0] sm:$0xff] %vm82, %v1819
    %1858 = vst.msk [vmem:[%s3 + $0xf8] sm:$0xff] %vm82, %v1824
    %v1859 = vcvt.s32.f32 %v768
    %v1860 = vcvt.s32.f32 %v769
    %1861 = vmatprep.subr.mxu0 %v1539
    %1862 = vmatpush1.xpose.msra.mxu0 %v1538
    %1863 = vmatprep.subr.mxu0 %v1541
    %1864 = vmatpush1.xpose.msra.mxu0 %v1540
    %1865 = vmatprep.subr.mxu0 %v1543
    %1866 = vmatpush1.xpose.msra.mxu0 %v1542
    %1867 = vmatprep.subr.mxu0 %v1545
    %1868 = vmatpush1.xpose.msra.mxu0 %v1544
    %1869 = vmatprep.subr.mxu0 %v1547
    %1870 = vmatpush1.xpose.msra.mxu0 %v1546
    %1871 = vmatprep.subr.mxu0 %v1549
    %1872 = vmatpush1.xpose.msra.mxu0 %v1548
    %1873 = vmatprep.subr.mxu0 %v1551
    %1874 = vmatpush1.xpose.msra.mxu0 %v1550
    %1875 = vmatprep.subr.mxu0 %v1553
    %1876 = vmatpush1.xpose.msra.mxu0 %v1552
    %1877 = vmatprep.subr.mxu0 %v1555
    %1878 = vmatpush1.xpose.msra.mxu0 %v1554
    %1879 = vmatprep.subr.mxu0 %v1557
    %1880 = vmatpush1.xpose.msra.mxu0 %v1556
    %1881 = vmatprep.subr.mxu0 %v1559
    %1882 = vmatpush1.xpose.msra.mxu0 %v1558
    %1883 = vmatprep.subr.mxu0 %v1561
    %1884 = vmatpush1.xpose.msra.mxu0 %v1560
    %1885 = vmatprep.subr.mxu0 %v1563
    %1886 = vmatpush1.xpose.msra.mxu0 %v1562
    %1887 = vmatprep.subr.mxu0 %v1565
    %1888 = vmatpush1.xpose.msra.mxu0 %v1564
    %1889 = vmatprep.subr.mxu0 %v1567
    %1890 = vmatpush1.xpose.msra.mxu0 %v1566
    %1891 = vmatprep.subr.mxu0 %v1569
    %1892 = vmatpush1.xpose.msra.mxu0 %v1568
    %1893 = vmatprep.subr.mxu0 %v1571
    %1894 = vmatpush1.xpose.msra.mxu0 %v1570
    %1895 = vmatprep.subr.mxu0 %v1573
    %1896 = vmatpush1.xpose.msra.mxu0 %v1572
    %1897 = vmatprep.subr.mxu0 %v1575
    %1898 = vmatpush1.xpose.msra.mxu0 %v1574
    %1899 = vmatprep.subr.mxu0 %v1577
    %1900 = vmatpush1.xpose.msra.mxu0 %v1576
    %1901 = vmatprep.subr.mxu0 %v1579
    %1902 = vmatpush1.xpose.msra.mxu0 %v1578
    %1903 = vmatprep.subr.mxu0 %v1581
    %1904 = vmatpush1.xpose.msra.mxu0 %v1580
    %1905 = vmatprep.subr.mxu0 %v1583
    %1906 = vmatpush1.xpose.msra.mxu0 %v1582
    %1907 = vmatprep.subr.mxu0 %v1585
    %1908 = vmatpush1.xpose.msra.mxu0 %v1584
    %1909 = vmatprep.subr.mxu0 %v1587
    %1910 = vmatpush1.xpose.msra.mxu0 %v1586
    %1911 = vmatprep.subr.mxu0 %v1589
    %1912 = vmatpush1.xpose.msra.mxu0 %v1588
    %1913 = vmatprep.subr.mxu0 %v1591
    %1914 = vmatpush1.xpose.msra.mxu0 %v1590
    %1915 = vmatprep.subr.mxu0 %v1593
    %1916 = vmatpush1.xpose.msra.mxu0 %v1592
    %1917 = vmatprep.subr.mxu0 %v1595
    %1918 = vmatpush1.xpose.msra.mxu0 %v1594
    %1919 = vmatprep.subr.mxu0 %v1597
    %1920 = vmatpush1.xpose.msra.mxu0 %v1596
    %1921 = vmatprep.subr.mxu0 %v1599
    %1922 = vmatpush1.xpose.msra.mxu0 %v1598
    %1923 = vmatprep.subr.mxu0 %v1601
    %1924 = vmatpush1.xpose.msra.mxu0 %v1600
    %1925 = vmatprep.mubr.f32.mxu0 %v1860
    %1926 = vmatmul.mubr.f32.gmra.mrb[0].mxu0 %v1859
    %v1927 = vpop.f32.mrb[0].mxu0
    %v1928 = vadd.f32 0.0, %v1927
    %v1929 = vpop.f32.mrb[0].mxu0
    %v1930 = vadd.f32 0.0, %v1929
    %1931 = vdwg.mxu0
    %v1932 = vcvt.f32.s32.to.zero.pseudo %v1928
    %v1933 = vcvt.f32.s32.to.zero.pseudo %v1930
    %v1934 = vcombine.low %v1932, %v1933
    %v1936 = vunpack.c.l.s4 1966171168
    %v1937 = vunpack.c.0.s8 %v1936
    %v1938 = vlaneseq
    %v1939 = vshrl.u32 %v1938, 7
    %v1940 = vsub.s32 %v1937, %v1939
    %v1941 = vrot.slane %v1934, %v1940
    %v1943 = vunpack.c.l.s4 1966171168
    %v1944 = vunpack.c.0.s8 %v1943
    %v1945 = vlaneseq
    %v1946 = vshrl.u32 %v1945, 7
    %v1947 = vsub.s32 %v1944, %v1946
    %v1948 = vrot.slane %v1941, %v1947
    %v1949 = vlaneseq
    %vm1950 = vcmp.ge.s32.totalorder %v1949, 0
    %vm1951 = vcmp.lt.s32.totalorder %v1949, 256
    %vm1952 = vmand %vm1950, %vm1951
    %1953 = vst.msk [vmem:[#allocation2] sm:$0x3] %vm1952, %v1948
    // Predicated region
    $region14: #{tpu_custom_call.1} parent=1 // pred_check
      _
    $region15: #{tpu_custom_call.1} parent=1 // pred_check_branch
      %1955 = sbr.rel (0) target = $region17
    $region16: #{tpu_custom_call.1} parent=1 // pred_region
      _
    $region17: #{tpu_custom_call.1} parent=1 // pred_fallthru
      _
    // Predicated region
    $region18: #{tpu_custom_call.1} parent=1 // pred_check
      _
    $region19: #{tpu_custom_call.1} parent=1 // pred_check_branch
      %1957 = sbr.rel (0) target = $region21
    $region20: #{tpu_custom_call.1} parent=1 // pred_region
      %s1959 = ssub.s32 32, 32
      %1960 = vsyncadd [#allocation3], %s1959
      %s1962 = sshll.u32 [#allocation2], 4
      %s1963 = int_to_ptr.vmem [resolvable:$true] %s1962
      %1965 = dma.vmem_to_hbm [thread:$0]  %s1963, 32, %s4, [#allocation3]
    $region21: #{tpu_custom_call.1} parent=1 // pred_fallthru
      _
    // Predicated region
    $region22: #{tpu_custom_call.1} parent=1 // pred_check
      _
    $region23: #{tpu_custom_call.1} parent=1 // pred_check_branch
      %1967 = sbr.rel (0) target = $region25
    $region24: #{tpu_custom_call.1} parent=1 // pred_region
      _
    $region25: #{tpu_custom_call.1} parent=1 // pred_fallthru
      _
    // Predicated region
    $region26: #{tpu_custom_call.1} parent=1 // pred_check
      _
    $region27: #{tpu_custom_call.1} parent=1 // pred_check_branch
      %1969 = sbr.rel (0) target = $region29
    $region28: #{tpu_custom_call.1} parent=1 // pred_region
      %1970 = dma.done [#allocation3], 32
    $region29: #{tpu_custom_call.1} parent=1 // pred_fallthru
      _
    %1971 = vsyncpa [#allocation3], 1

</llo_original>
